<compile_context>
chip_gen: v7x
topology: tpu7x:2x2x1
jax: 0.10.0
libtpu: 0.0.40
codegen_flags: <defaults>
</compile_context>

<pallas_src>
import functools

import jax
import jax.numpy as jnp
from jax.experimental import pallas as pl
from jax.experimental.pallas import tpu as pltpu


_VMEM_LIMIT = 32 * 1024 * 1024  # safe on v5e/v6e/v7x; tiles below are far under this.


def _pick_tile(dim, target, align):
    """Largest multiple of `align` <= target that divides dim, else full dim."""
    if dim <= target:
        return dim
    t = (target // align) * align
    while t >= align:
        if dim % t == 0:
            return t
        t -= align
    return dim


# ---------------- tiled dense: matmul + bias (+ optional GELU) ----------------
def _dense_kernel(x_ref, w_ref, b_ref, o_ref, acc_ref, *, activation):
    @pl.when(pl.program_id(2) == 0)
    def _():
        acc_ref[...] = jnp.zeros_like(acc_ref)

    acc_ref[...] += jnp.dot(x_ref[...], w_ref[...],
                            preferred_element_type=jnp.float32)

    @pl.when(pl.program_id(2) == pl.num_programs(2) - 1)
    def _():
        y = acc_ref[...] + b_ref[...]
        if activation == "gelu":
            # TODO(synk): HF 'gelu' is the exact erf form; tanh approximation is
            # used here for guaranteed Mosaic lowering (drift ~1e-3).
            y = jax.nn.gelu(y, approximate=True)
        o_ref[...] = y.astype(o_ref.dtype)


def dense(x, w, b, activation="none", out_dtype=None):
    M, K = x.shape
    _, N = w.shape
    out_dtype = out_dtype or x.dtype
    tm = _pick_tile(M, 256, 8)
    tn = _pick_tile(N, 256, 128)
    tk = _pick_tile(K, 512, 128)
    kernel = functools.partial(_dense_kernel, activation=activation)
    return pl.pallas_call(
        kernel,
        out_shape=jax.ShapeDtypeStruct((M, N), out_dtype),
        grid=(M // tm, N // tn, K // tk),
        in_specs=[
            pl.BlockSpec((tm, tk), lambda i, j, k: (i, k)),
            pl.BlockSpec((tk, tn), lambda i, j, k: (k, j)),
            pl.BlockSpec((1, tn), lambda i, j, k: (0, j)),
        ],
        out_specs=pl.BlockSpec((tm, tn), lambda i, j, k: (i, j)),
        scratch_shapes=[pltpu.VMEM((tm, tn), jnp.float32)],
        compiler_params=pltpu.CompilerParams(
            dimension_semantics=("parallel", "parallel", "arbitrary"),
            vmem_limit_bytes=_VMEM_LIMIT),
    )(x, w, b.reshape(1, N))


# -------- fused dense + residual-add + LayerNorm (output proj / FFN-2) --------
def _dense_add_ln_kernel(x_ref, w_ref, b_ref, r_ref, g_ref, bb_ref,
                         o_ref, acc_ref, *, eps):
    @pl.when(pl.program_id(1) == 0)
    def _():
        acc_ref[...] = jnp.zeros_like(acc_ref)

    acc_ref[...] += jnp.dot(x_ref[...], w_ref[...],
                            preferred_element_type=jnp.float32)

    @pl.when(pl.program_id(1) == pl.num_programs(1) - 1)
    def _():
        y = acc_ref[...] + b_ref[...] + r_ref[...].astype(jnp.float32)
        mean = jnp.mean(y, axis=-1, keepdims=True)
        var = jnp.mean(jnp.square(y - mean), axis=-1, keepdims=True)
        yn = (y - mean) * jax.lax.rsqrt(var + eps)
        o_ref[...] = (yn * g_ref[...] + bb_ref[...]).astype(o_ref.dtype)


def dense_add_ln(x, w, b, res, gamma, beta, eps=1e-12, out_dtype=None):
    M, K = x.shape
    _, N = w.shape                       # N == hidden (full row needed for LN)
    out_dtype = out_dtype or res.dtype
    tm = _pick_tile(M, 256, 8)
    tk = _pick_tile(K, 512, 128)
    kernel = functools.partial(_dense_add_ln_kernel, eps=eps)
    return pl.pallas_call(
        kernel,
        out_shape=jax.ShapeDtypeStruct((M, N), out_dtype),
        grid=(M // tm, K // tk),
        in_specs=[
            pl.BlockSpec((tm, tk), lambda i, k: (i, k)),
            pl.BlockSpec((tk, N), lambda i, k: (k, 0)),
            pl.BlockSpec((1, N), lambda i, k: (0, 0)),
            pl.BlockSpec((tm, N), lambda i, k: (i, 0)),
            pl.BlockSpec((1, N), lambda i, k: (0, 0)),
            pl.BlockSpec((1, N), lambda i, k: (0, 0)),
        ],
        out_specs=pl.BlockSpec((tm, N), lambda i, k: (i, 0)),
        scratch_shapes=[pltpu.VMEM((tm, N), jnp.float32)],
        compiler_params=pltpu.CompilerParams(
            dimension_semantics=("parallel", "arbitrary"),
            vmem_limit_bytes=_VMEM_LIMIT),
    )(x, w, b.reshape(1, N), res, gamma.reshape(1, N), beta.reshape(1, N))


# ---------------- row-tiled add + LayerNorm (embeddings) ----------------
def _add_ln_kernel(x_ref, r_ref, g_ref, b_ref, o_ref, *, eps):
    x = x_ref[...].astype(jnp.float32) + r_ref[...].astype(jnp.float32)
    mean = jnp.mean(x, axis=-1, keepdims=True)
    var = jnp.mean(jnp.square(x - mean), axis=-1, keepdims=True)
    y = (x - mean) * jax.lax.rsqrt(var + eps)
    o_ref[...] = (y * g_ref[...] + b_ref[...]).astype(o_ref.dtype)


def add_layernorm(x, res, gamma, beta, eps=1e-12, out_dtype=None):
    M, H = x.shape
    out_dtype = out_dtype or x.dtype
    tm = _pick_tile(M, 512, 8)
    kernel = functools.partial(_add_ln_kernel, eps=eps)
    return pl.pallas_call(
        kernel,
        out_shape=jax.ShapeDtypeStruct((M, H), out_dtype),
        grid=(M // tm,),
        in_specs=[
            pl.BlockSpec((tm, H), lambda i: (i, 0)),
            pl.BlockSpec((tm, H), lambda i: (i, 0)),
            pl.BlockSpec((1, H), lambda i: (0, 0)),
            pl.BlockSpec((1, H), lambda i: (0, 0)),
        ],
        out_specs=pl.BlockSpec((tm, H), lambda i: (i, 0)),
        compiler_params=pltpu.CompilerParams(
            dimension_semantics=("parallel",),
            vmem_limit_bytes=_VMEM_LIMIT),
    )(x, res, gamma.reshape(1, H), beta.reshape(1, H))


# ---------- attention: one grid step per batch, all heads in-kernel ----------
def _attn_kernel(q_ref, k_ref, v_ref, m_ref, o_ref, *, scale, n_heads, dh):
    q = q_ref[0]                      # (S, H)  bf16
    k = k_ref[0]                      # (S, H)
    v = v_ref[0]                      # (S, H)
    mask = m_ref[0]                   # (1, S)  f32, 1 = keep, 0 = mask
    bias = (1.0 - mask) * (-1e9)      # additive mask, broadcast over rows
    ctxs = []
    for h in range(n_heads):          # static unroll over heads
        qh = q[:, h * dh:(h + 1) * dh]
        kh = k[:, h * dh:(h + 1) * dh]
        vh = v[:, h * dh:(h + 1) * dh]
        s = jnp.dot(qh, kh.T, preferred_element_type=jnp.float32) * scale + bias
        s = s - jnp.max(s, axis=-1, keepdims=True)
        p = jnp.exp(s)
        p = p * pl.reciprocal(jnp.sum(p, axis=-1, keepdims=True), approx=True)
        ctxs.append(jnp.dot(p.astype(vh.dtype), vh,
                            preferred_element_type=jnp.float32))
    # Single lane-dense (S, H) store instead of per-head partial stores.
    o_ref[0] = jnp.concatenate(ctxs, axis=-1).astype(o_ref.dtype)


def attention(q, k, v, mask, scale, n_heads):
    # q, k, v: (B, S, H); mask: (B, 1, S)
    # TODO(synk): for long sequences add a KV-tile 'arbitrary' grid axis with
    # online (flash-style) softmax instead of materializing the full (S,S) scores.
    B, S, H = q.shape
    dh = H // n_heads
    kernel = functools.partial(_attn_kernel, scale=scale, n_heads=n_heads, dh=dh)
    blk = pl.BlockSpec((1, S, H), lambda b: (b, 0, 0))
    return pl.pallas_call(
        kernel,
        out_shape=jax.ShapeDtypeStruct((B, S, H), q.dtype),
        grid=(B,),
        in_specs=[blk, blk, blk,
                  pl.BlockSpec((1, 1, S), lambda b: (b, 0, 0))],
        out_specs=blk,
        compiler_params=pltpu.CompilerParams(
            dimension_semantics=("parallel",),
            vmem_limit_bytes=_VMEM_LIMIT),
    )(q, k, v, mask)


# ---------------- parameters ----------------
def init_params(key, cfg):
    H, I, L = cfg["hidden"], cfg["intermediate"], cfg["layers"]
    V, P = cfg["vocab"], cfg["max_pos"]
    std = 0.02
    keys = iter(jax.random.split(key, 8 + 4 * L))

    def nrm(shape, dtype=jnp.bfloat16):
        return (std * jax.random.normal(next(keys), shape, jnp.float32)).astype(dtype)

    params = {
        "word_emb": nrm((V, H), jnp.float32),
        "pos_emb": nrm((P, H), jnp.float32),
        "type_emb": nrm((2, H), jnp.float32),
        "emb_ln_g": jnp.ones((H,), jnp.float32),
        "emb_ln_b": jnp.zeros((H,), jnp.float32),
        "layers": [],
        # Classifier lane-padded to 128 output columns (first 2 are real).
        "cls_w": jnp.zeros((H, 128), jnp.bfloat16).at[:, :2].set(nrm((H, 2))),
        "cls_b": jnp.zeros((128,), jnp.float32),
    }
    for _ in range(L):
        params["layers"].append({
            "wqkv": nrm((H, 3 * H)), "bqkv": jnp.zeros((3 * H,), jnp.float32),
            "wo": nrm((H, H)), "bo": jnp.zeros((H,), jnp.float32),
            "ln1_g": jnp.ones((H,), jnp.float32), "ln1_b": jnp.zeros((H,), jnp.float32),
            "w1": nrm((H, I)), "b1": jnp.zeros((I,), jnp.float32),
            "w2": nrm((I, H)), "b2": jnp.zeros((H,), jnp.float32),
            "ln2_g": jnp.ones((H,), jnp.float32), "ln2_b": jnp.zeros((H,), jnp.float32),
        })
    return params


# ---------------- forward (mirrors OurBERTModel.forward) ----------------
def bert_forward(params, text, att_mask, *, cfg):
    B, S = text.shape
    H, nH = cfg["hidden"], cfg["heads"]
    dh = H // nH
    scale = 1.0 / (dh ** 0.5)
    M = B * S

    # Embeddings: word + position + token_type(=0) -> LayerNorm.
    # (gather stays in XLA glue; add + LayerNorm is a row-tiled Pallas kernel)
    word = params["word_emb"][text]                                  # (B, S, H) f32
    pos = params["pos_emb"][:S][None, :, :]
    typ = params["type_emb"][0][None, None, :]                       # token_type_ids == 0
    extra = jnp.broadcast_to(pos + typ, (B, S, H))
    x = add_layernorm(word.reshape(M, H), extra.reshape(M, H),
                      params["emb_ln_g"], params["emb_ln_b"],
                      out_dtype=jnp.bfloat16)                        # (M, H) bf16

    mask = att_mask.astype(jnp.float32).reshape(B, 1, S)             # (B, 1, S)

    for lyr in params["layers"]:
        # fused QKV projection: one (H, 3H) matmul
        qkv = dense(x, lyr["wqkv"], lyr["bqkv"]).reshape(B, S, 3 * H)
        q, k, v = qkv[..., :H], qkv[..., H:2 * H], qkv[..., 2 * H:]
        ctx = attention(q, k, v, mask, scale, nH)                    # (B, S, H) bf16
        # output projection + residual + LayerNorm fused
        x = dense_add_ln(ctx.reshape(M, H), lyr["wo"], lyr["bo"], x,
                         lyr["ln1_g"], lyr["ln1_b"])
        # FFN
        h = dense(x, lyr["w1"], lyr["b1"], activation="gelu")
        x = dense_add_ln(h, lyr["w2"], lyr["b2"], x,
                         lyr["ln2_g"], lyr["ln2_b"])

    # nn.Dropout(hidden_dropout_prob) is identity at inference time.
    # Classifier: lane-padded (H, 128) matmul in Pallas, slice real 2 logits in JAX.
    logits = dense(x, params["cls_w"], params["cls_b"], out_dtype=jnp.float32)
    return logits[:, :2].reshape(B, S, 2)


if __name__ == "__main__":
    cfg = dict(vocab=100, hidden=32, heads=4, layers=2, intermediate=64, max_pos=16)
    B, S = 2, 8

    key = jax.random.PRNGKey(0)
    pkey, tkey = jax.random.split(key)
    params = init_params(pkey, cfg)

    text = jax.random.randint(tkey, (B, S), 0, cfg["vocab"], dtype=jnp.int32)
    att_mask = jnp.ones((B, S), dtype=jnp.int32).at[1, 6:].set(0)    # pad last 2 of row 1

    fwd = jax.jit(functools.partial(bert_forward, cfg=cfg))
    out = fwd(params, text, att_mask)
    jax.block_until_ready(out)
    assert out.shape == (B, S, 2) and out.dtype == jnp.float32
    print("KERNEL_OK")
</pallas_src>

<mosaic_0001>
module attributes {stable_mosaic.version = 11 : i64} {
  func.func @_add_ln_kernel(%arg0: i32, %arg1: memref<16x32xf32, #tpu.memory_space<vmem>>, %arg2: memref<16x32xf32, #tpu.memory_space<vmem>>, %arg3: memref<1x32xf32, #tpu.memory_space<vmem>>, %arg4: memref<1x32xf32, #tpu.memory_space<vmem>>, %arg5: memref<16x32xbf16, #tpu.memory_space<vmem>>) attributes {dimension_semantics = [#tpu.dimension_semantics<parallel>], iteration_bounds = array<i64: 1>, scalar_prefetch = 0 : i64, scratch_operands = 0 : i64, tpu.core_type = #tpu.core_type<tc>, window_params = [{transform_indices = @transform_0, window_bounds = array<i64: 16, 32>}, {transform_indices = @transform_1, window_bounds = array<i64: 16, 32>}, {pipeline_mode = #tpu.pipeline_mode<synchronous>, transform_indices = @transform_2, window_bounds = array<i64: 1, 32>}, {pipeline_mode = #tpu.pipeline_mode<synchronous>, transform_indices = @transform_3, window_bounds = array<i64: 1, 32>}, {transform_indices = @transform_4, window_bounds = array<i64: 16, 32>}]} {
    %c0 = arith.constant 0 : index
    %c0_0 = arith.constant 0 : index
    %0 = vector.load %arg1[%c0, %c0_0] : memref<16x32xf32, #tpu.memory_space<vmem>>, vector<16x32xf32>
    %c0_1 = arith.constant 0 : index
    %c0_2 = arith.constant 0 : index
    %1 = vector.load %arg2[%c0_1, %c0_2] : memref<16x32xf32, #tpu.memory_space<vmem>>, vector<16x32xf32>
    %2 = arith.addf %0, %1 : vector<16x32xf32>
    %cst = arith.constant dense<0.000000e+00> : vector<16xf32>
    %3 = vector.multi_reduction <add>, %2, %cst [1] : vector<16x32xf32> to vector<16xf32>
    %4 = vector.shape_cast %3 : vector<16xf32> to vector<16x1xf32>
    %cst_3 = arith.constant 3.200000e+01 : f32
    %5 = vector.broadcast %cst_3 : f32 to vector<16x1xf32>
    %6 = arith.divf %4, %5 : vector<16x1xf32>
    %7 = vector.broadcast %6 : vector<16x1xf32> to vector<16x32xf32>
    %8 = arith.subf %2, %7 : vector<16x32xf32>
    %9 = arith.mulf %8, %8 : vector<16x32xf32>
    %cst_4 = arith.constant dense<0.000000e+00> : vector<16xf32>
    %10 = vector.multi_reduction <add>, %9, %cst_4 [1] : vector<16x32xf32> to vector<16xf32>
    %11 = vector.shape_cast %10 : vector<16xf32> to vector<16x1xf32>
    %cst_5 = arith.constant 3.200000e+01 : f32
    %12 = vector.broadcast %cst_5 : f32 to vector<16x1xf32>
    %13 = arith.divf %11, %12 : vector<16x1xf32>
    %14 = vector.broadcast %6 : vector<16x1xf32> to vector<16x32xf32>
    %15 = arith.subf %2, %14 : vector<16x32xf32>
    %cst_6 = arith.constant 9.99999996E-13 : f32
    %16 = vector.broadcast %cst_6 : f32 to vector<16x1xf32>
    %17 = arith.addf %13, %16 : vector<16x1xf32>
    %18 = math.rsqrt %17 : vector<16x1xf32>
    %19 = vector.broadcast %18 : vector<16x1xf32> to vector<16x32xf32>
    %20 = arith.mulf %15, %19 : vector<16x32xf32>
    %c0_7 = arith.constant 0 : index
    %c0_8 = arith.constant 0 : index
    %21 = vector.load %arg3[%c0_7, %c0_8] : memref<1x32xf32, #tpu.memory_space<vmem>>, vector<1x32xf32>
    %22 = vector.broadcast %21 : vector<1x32xf32> to vector<16x32xf32>
    %23 = arith.mulf %20, %22 : vector<16x32xf32>
    %c0_9 = arith.constant 0 : index
    %c0_10 = arith.constant 0 : index
    %24 = vector.load %arg4[%c0_9, %c0_10] : memref<1x32xf32, #tpu.memory_space<vmem>>, vector<1x32xf32>
    %25 = vector.broadcast %24 : vector<1x32xf32> to vector<16x32xf32>
    %26 = arith.addf %23, %25 : vector<16x32xf32>
    %27 = arith.truncf %26 : vector<16x32xf32> to vector<16x32xbf16>
    %c0_11 = arith.constant 0 : index
    %c0_12 = arith.constant 0 : index
    %28 = vector.load %arg5[%c0_11, %c0_12] : memref<16x32xbf16, #tpu.memory_space<vmem>>, vector<16x32xbf16>
    tpu.vector_store %arg5[%c0_11, %c0_12], %27 {strides = array<i32>} : memref<16x32xbf16, #tpu.memory_space<vmem>>, vector<16x32xbf16>,
    return
  }
  func.func @transform_0(%arg0: i32) -> (i32, i32) {
    %c0_i32 = arith.constant 0 : i32
    %c0_i32_0 = arith.constant 0 : i32
    return %arg0, %c0_i32 : i32, i32
  }
  func.func @transform_1(%arg0: i32) -> (i32, i32) {
    %c0_i32 = arith.constant 0 : i32
    %c0_i32_0 = arith.constant 0 : i32
    return %arg0, %c0_i32 : i32, i32
  }
  func.func @transform_2(%arg0: i32) -> (i32, i32) {
    %c0_i32 = arith.constant 0 : i32
    %c0_i32_0 = arith.constant 0 : i32
    %c0_i32_1 = arith.constant 0 : i32
    return %c0_i32, %c0_i32_0 : i32, i32
  }
  func.func @transform_3(%arg0: i32) -> (i32, i32) {
    %c0_i32 = arith.constant 0 : i32
    %c0_i32_0 = arith.constant 0 : i32
    %c0_i32_1 = arith.constant 0 : i32
    return %c0_i32, %c0_i32_0 : i32, i32
  }
  func.func @transform_4(%arg0: i32) -> (i32, i32) {
    %c0_i32 = arith.constant 0 : i32
    %c0_i32_0 = arith.constant 0 : i32
    return %arg0, %c0_i32 : i32, i32
  }
}

module attributes {stable_mosaic.version = 11 : i64} {
  func.func @_dense_kernel(%arg0: i32, %arg1: i32, %arg2: i32, %arg3: memref<16x32xbf16, #tpu.memory_space<vmem>>, %arg4: memref<32x96xbf16, #tpu.memory_space<vmem>>, %arg5: memref<1x96xf32, #tpu.memory_space<vmem>>, %arg6: memref<16x96xbf16, #tpu.memory_space<vmem>>, %arg7: memref<16x96xf32, #tpu.memory_space<vmem>>) attributes {dimension_semantics = [#tpu.dimension_semantics<parallel>, #tpu.dimension_semantics<parallel>, #tpu.dimension_semantics<arbitrary>], iteration_bounds = array<i64: 1, 1, 1>, scalar_prefetch = 0 : i64, scratch_operands = 1 : i64, tpu.core_type = #tpu.core_type<tc>, window_params = [{transform_indices = @transform_0, window_bounds = array<i64: 16, 32>}, {transform_indices = @transform_1, window_bounds = array<i64: 32, 96>}, {transform_indices = @transform_2, window_bounds = array<i64: 1, 96>}, {transform_indices = @transform_3, window_bounds = array<i64: 16, 96>}]} {
    %c0_i32 = arith.constant 0 : i32
    %0 = arith.cmpi eq, %arg2, %c0_i32 : i32
    %1 = arith.extui %0 : i1 to i32
    %c0_i32_0 = arith.constant 0 : i32
    %2 = arith.cmpi ne, %1, %c0_i32_0 : i32
    scf.if %2 {
      %cst_10 = arith.constant 0.000000e+00 : f32
      %12 = vector.broadcast %cst_10 : f32 to vector<16x96xf32>
      %c0_11 = arith.constant 0 : index
      %c0_12 = arith.constant 0 : index
      %13 = vector.load %arg7[%c0_11, %c0_12] : memref<16x96xf32, #tpu.memory_space<vmem>>, vector<16x96xf32>
      tpu.vector_store %arg7[%c0_11, %c0_12], %12 {strides = array<i32>} : memref<16x96xf32, #tpu.memory_space<vmem>>, vector<16x96xf32>,
    } else {
    }
    %c0 = arith.constant 0 : index
    %c0_1 = arith.constant 0 : index
    %3 = vector.load %arg7[%c0, %c0_1] : memref<16x96xf32, #tpu.memory_space<vmem>>, vector<16x96xf32>
    %c0_2 = arith.constant 0 : index
    %c0_3 = arith.constant 0 : index
    %4 = vector.load %arg3[%c0_2, %c0_3] : memref<16x32xbf16, #tpu.memory_space<vmem>>, vector<16x32xbf16>
    %c0_4 = arith.constant 0 : index
    %c0_5 = arith.constant 0 : index
    %5 = vector.load %arg4[%c0_4, %c0_5] : memref<32x96xbf16, #tpu.memory_space<vmem>>, vector<32x96xbf16>
    %cst = arith.constant dense<0.000000e+00> : vector<16x96xf32>
    %6 = tpu.matmul %4, %5, %cst {dimension_numbers = #tpu.dot_dimension_numbers<[1], [0], [0], [1], [0, 0, 1, 1], [], []>} : vector<16x32xbf16>, vector<32x96xbf16>, vector<16x96xf32> -> vector<16x96xf32>
    %7 = arith.addf %3, %6 : vector<16x96xf32>
    %c0_6 = arith.constant 0 : index
    %c0_7 = arith.constant 0 : index
    %8 = vector.load %arg7[%c0_6, %c0_7] : memref<16x96xf32, #tpu.memory_space<vmem>>, vector<16x96xf32>
    tpu.vector_store %arg7[%c0_6, %c0_7], %7 {strides = array<i32>} : memref<16x96xf32, #tpu.memory_space<vmem>>, vector<16x96xf32>,
    %c0_i32_8 = arith.constant 0 : i32
    %9 = arith.cmpi eq, %arg2, %c0_i32_8 : i32
    %10 = arith.extui %9 : i1 to i32
    %c0_i32_9 = arith.constant 0 : i32
    %11 = arith.cmpi ne, %10, %c0_i32_9 : i32
    scf.if %11 {
      %c0_10 = arith.constant 0 : index
      %c0_11 = arith.constant 0 : index
      %12 = vector.load %arg7[%c0_10, %c0_11] : memref<16x96xf32, #tpu.memory_space<vmem>>, vector<16x96xf32>
      %c0_12 = arith.constant 0 : index
      %c0_13 = arith.constant 0 : index
      %13 = vector.load %arg5[%c0_12, %c0_13] : memref<1x96xf32, #tpu.memory_space<vmem>>, vector<1x96xf32>
      %14 = vector.broadcast %13 : vector<1x96xf32> to vector<16x96xf32>
      %15 = arith.addf %12, %14 : vector<16x96xf32>
      %16 = arith.truncf %15 : vector<16x96xf32> to vector<16x96xbf16>
      %c0_14 = arith.constant 0 : index
      %c0_15 = arith.constant 0 : index
      %17 = vector.load %arg6[%c0_14, %c0_15] : memref<16x96xbf16, #tpu.memory_space<vmem>>, vector<16x96xbf16>
      tpu.vector_store %arg6[%c0_14, %c0_15], %16 {strides = array<i32>} : memref<16x96xbf16, #tpu.memory_space<vmem>>, vector<16x96xbf16>,
    } else {
    }
    return
  }
  func.func @transform_0(%arg0: i32, %arg1: i32, %arg2: i32) -> (i32, i32) {
    %c0_i32 = arith.constant 0 : i32
    return %arg0, %arg2 : i32, i32
  }
  func.func @transform_1(%arg0: i32, %arg1: i32, %arg2: i32) -> (i32, i32) {
    %c0_i32 = arith.constant 0 : i32
    return %arg2, %arg1 : i32, i32
  }
  func.func @transform_2(%arg0: i32, %arg1: i32, %arg2: i32) -> (i32, i32) {
    %c0_i32 = arith.constant 0 : i32
    %c0_i32_0 = arith.constant 0 : i32
    return %c0_i32, %arg1 : i32, i32
  }
  func.func @transform_3(%arg0: i32, %arg1: i32, %arg2: i32) -> (i32, i32) {
    %c0_i32 = arith.constant 0 : i32
    return %arg0, %arg1 : i32, i32
  }
}

module attributes {stable_mosaic.version = 11 : i64} {
  func.func @_dense_add_ln_kernel(%arg0: i32, %arg1: i32, %arg2: memref<16x32xbf16, #tpu.memory_space<vmem>>, %arg3: memref<32x32xbf16, #tpu.memory_space<vmem>>, %arg4: memref<1x32xf32, #tpu.memory_space<vmem>>, %arg5: memref<16x32xbf16, #tpu.memory_space<vmem>>, %arg6: memref<1x32xf32, #tpu.memory_space<vmem>>, %arg7: memref<1x32xf32, #tpu.memory_space<vmem>>, %arg8: memref<16x32xbf16, #tpu.memory_space<vmem>>, %arg9: memref<16x32xf32, #tpu.memory_space<vmem>>) attributes {dimension_semantics = [#tpu.dimension_semantics<parallel>, #tpu.dimension_semantics<arbitrary>], iteration_bounds = array<i64: 1, 1>, scalar_prefetch = 0 : i64, scratch_operands = 1 : i64, tpu.core_type = #tpu.core_type<tc>, window_params = [{transform_indices = @transform_0, window_bounds = array<i64: 16, 32>}, {transform_indices = @transform_1, window_bounds = array<i64: 32, 32>}, {pipeline_mode = #tpu.pipeline_mode<synchronous>, transform_indices = @transform_2, window_bounds = array<i64: 1, 32>}, {transform_indices = @transform_3, window_bounds = array<i64: 16, 32>}, {pipeline_mode = #tpu.pipeline_mode<synchronous>, transform_indices = @transform_4, window_bounds = array<i64: 1, 32>}, {pipeline_mode = #tpu.pipeline_mode<synchronous>, transform_indices = @transform_5, window_bounds = array<i64: 1, 32>}, {transform_indices = @transform_6, window_bounds = array<i64: 16, 32>}]} {
    %c0_i32 = arith.constant 0 : i32
    %0 = arith.cmpi eq, %arg1, %c0_i32 : i32
    %1 = arith.extui %0 : i1 to i32
    %c0_i32_0 = arith.constant 0 : i32
    %2 = arith.cmpi ne, %1, %c0_i32_0 : i32
    scf.if %2 {
      %cst_10 = arith.constant 0.000000e+00 : f32
      %12 = vector.broadcast %cst_10 : f32 to vector<16x32xf32>
      %c0_11 = arith.constant 0 : index
      %c0_12 = arith.constant 0 : index
      %13 = vector.load %arg9[%c0_11, %c0_12] : memref<16x32xf32, #tpu.memory_space<vmem>>, vector<16x32xf32>
      tpu.vector_store %arg9[%c0_11, %c0_12], %12 {strides = array<i32>} : memref<16x32xf32, #tpu.memory_space<vmem>>, vector<16x32xf32>,
    } else {
    }
    %c0 = arith.constant 0 : index
    %c0_1 = arith.constant 0 : index
    %3 = vector.load %arg9[%c0, %c0_1] : memref<16x32xf32, #tpu.memory_space<vmem>>, vector<16x32xf32>
    %c0_2 = arith.constant 0 : index
    %c0_3 = arith.constant 0 : index
    %4 = vector.load %arg2[%c0_2, %c0_3] : memref<16x32xbf16, #tpu.memory_space<vmem>>, vector<16x32xbf16>
    %c0_4 = arith.constant 0 : index
    %c0_5 = arith.constant 0 : index
    %5 = vector.load %arg3[%c0_4, %c0_5] : memref<32x32xbf16, #tpu.memory_space<vmem>>, vector<32x32xbf16>
    %cst = arith.constant dense<0.000000e+00> : vector<16x32xf32>
    %6 = tpu.matmul %4, %5, %cst {dimension_numbers = #tpu.dot_dimension_numbers<[1], [0], [0], [1], [0, 0, 1, 1], [], []>} : vector<16x32xbf16>, vector<32x32xbf16>, vector<16x32xf32> -> vector<16x32xf32>
    %7 = arith.addf %3, %6 : vector<16x32xf32>
    %c0_6 = arith.constant 0 : index
    %c0_7 = arith.constant 0 : index
    %8 = vector.load %arg9[%c0_6, %c0_7] : memref<16x32xf32, #tpu.memory_space<vmem>>, vector<16x32xf32>
    tpu.vector_store %arg9[%c0_6, %c0_7], %7 {strides = array<i32>} : memref<16x32xf32, #tpu.memory_space<vmem>>, vector<16x32xf32>,
    %c0_i32_8 = arith.constant 0 : i32
    %9 = arith.cmpi eq, %arg1, %c0_i32_8 : i32
    %10 = arith.extui %9 : i1 to i32
    %c0_i32_9 = arith.constant 0 : i32
    %11 = arith.cmpi ne, %10, %c0_i32_9 : i32
    scf.if %11 {
      %c0_10 = arith.constant 0 : index
      %c0_11 = arith.constant 0 : index
      %12 = vector.load %arg9[%c0_10, %c0_11] : memref<16x32xf32, #tpu.memory_space<vmem>>, vector<16x32xf32>
      %c0_12 = arith.constant 0 : index
      %c0_13 = arith.constant 0 : index
      %13 = vector.load %arg4[%c0_12, %c0_13] : memref<1x32xf32, #tpu.memory_space<vmem>>, vector<1x32xf32>
      %14 = vector.broadcast %13 : vector<1x32xf32> to vector<16x32xf32>
      %15 = arith.addf %12, %14 : vector<16x32xf32>
      %c0_14 = arith.constant 0 : index
      %c0_15 = arith.constant 0 : index
      %16 = vector.load %arg5[%c0_14, %c0_15] : memref<16x32xbf16, #tpu.memory_space<vmem>>, vector<16x32xbf16>
      %17 = arith.extf %16 : vector<16x32xbf16> to vector<16x32xf32>
      %18 = arith.addf %15, %17 : vector<16x32xf32>
      %cst_16 = arith.constant dense<0.000000e+00> : vector<16xf32>
      %19 = vector.multi_reduction <add>, %18, %cst_16 [1] : vector<16x32xf32> to vector<16xf32>
      %20 = vector.shape_cast %19 : vector<16xf32> to vector<16x1xf32>
      %cst_17 = arith.constant 3.200000e+01 : f32
      %21 = vector.broadcast %cst_17 : f32 to vector<16x1xf32>
      %22 = arith.divf %20, %21 : vector<16x1xf32>
      %23 = vector.broadcast %22 : vector<16x1xf32> to vector<16x32xf32>
      %24 = arith.subf %18, %23 : vector<16x32xf32>
      %25 = arith.mulf %24, %24 : vector<16x32xf32>
      %cst_18 = arith.constant dense<0.000000e+00> : vector<16xf32>
      %26 = vector.multi_reduction <add>, %25, %cst_18 [1] : vector<16x32xf32> to vector<16xf32>
      %27 = vector.shape_cast %26 : vector<16xf32> to vector<16x1xf32>
      %cst_19 = arith.constant 3.200000e+01 : f32
      %28 = vector.broadcast %cst_19 : f32 to vector<16x1xf32>
      %29 = arith.divf %27, %28 : vector<16x1xf32>
      %30 = vector.broadcast %22 : vector<16x1xf32> to vector<16x32xf32>
      %31 = arith.subf %18, %30 : vector<16x32xf32>
      %cst_20 = arith.constant 9.99999996E-13 : f32
      %32 = vector.broadcast %cst_20 : f32 to vector<16x1xf32>
      %33 = arith.addf %29, %32 : vector<16x1xf32>
      %34 = math.rsqrt %33 : vector<16x1xf32>
      %35 = vector.broadcast %34 : vector<16x1xf32> to vector<16x32xf32>
      %36 = arith.mulf %31, %35 : vector<16x32xf32>
      %c0_21 = arith.constant 0 : index
      %c0_22 = arith.constant 0 : index
      %37 = vector.load %arg6[%c0_21, %c0_22] : memref<1x32xf32, #tpu.memory_space<vmem>>, vector<1x32xf32>
      %38 = vector.broadcast %37 : vector<1x32xf32> to vector<16x32xf32>
      %39 = arith.mulf %36, %38 : vector<16x32xf32>
      %c0_23 = arith.constant 0 : index
      %c0_24 = arith.constant 0 : index
      %40 = vector.load %arg7[%c0_23, %c0_24] : memref<1x32xf32, #tpu.memory_space<vmem>>, vector<1x32xf32>
      %41 = vector.broadcast %40 : vector<1x32xf32> to vector<16x32xf32>
      %42 = arith.addf %39, %41 : vector<16x32xf32>
      %43 = arith.truncf %42 : vector<16x32xf32> to vector<16x32xbf16>
      %c0_25 = arith.constant 0 : index
      %c0_26 = arith.constant 0 : index
      %44 = vector.load %arg8[%c0_25, %c0_26] : memref<16x32xbf16, #tpu.memory_space<vmem>>, vector<16x32xbf16>
      tpu.vector_store %arg8[%c0_25, %c0_26], %43 {strides = array<i32>} : memref<16x32xbf16, #tpu.memory_space<vmem>>, vector<16x32xbf16>,
    } else {
    }
    return
  }
  func.func @transform_0(%arg0: i32, %arg1: i32) -> (i32, i32) {
    %c0_i32 = arith.constant 0 : i32
    return %arg0, %arg1 : i32, i32
  }
  func.func @transform_1(%arg0: i32, %arg1: i32) -> (i32, i32) {
    %c0_i32 = arith.constant 0 : i32
    %c0_i32_0 = arith.constant 0 : i32
    return %arg1, %c0_i32 : i32, i32
  }
  func.func @transform_2(%arg0: i32, %arg1: i32) -> (i32, i32) {
    %c0_i32 = arith.constant 0 : i32
    %c0_i32_0 = arith.constant 0 : i32
    %c0_i32_1 = arith.constant 0 : i32
    return %c0_i32, %c0_i32_0 : i32, i32
  }
  func.func @transform_3(%arg0: i32, %arg1: i32) -> (i32, i32) {
    %c0_i32 = arith.constant 0 : i32
    %c0_i32_0 = arith.constant 0 : i32
    return %arg0, %c0_i32 : i32, i32
  }
  func.func @transform_4(%arg0: i32, %arg1: i32) -> (i32, i32) {
    %c0_i32 = arith.constant 0 : i32
    %c0_i32_0 = arith.constant 0 : i32
    %c0_i32_1 = arith.constant 0 : i32
    return %c0_i32, %c0_i32_0 : i32, i32
  }
  func.func @transform_5(%arg0: i32, %arg1: i32) -> (i32, i32) {
    %c0_i32 = arith.constant 0 : i32
    %c0_i32_0 = arith.constant 0 : i32
    %c0_i32_1 = arith.constant 0 : i32
    return %c0_i32, %c0_i32_0 : i32, i32
  }
  func.func @transform_6(%arg0: i32, %arg1: i32) -> (i32, i32) {
    %c0_i32 = arith.constant 0 : i32
    %c0_i32_0 = arith.constant 0 : i32
    return %arg0, %c0_i32 : i32, i32
  }
}

module attributes {stable_mosaic.version = 11 : i64} {
  func.func @_attn_kernel(%arg0: i32, %arg1: memref<1x8x32xbf16, #tpu.memory_space<vmem>>, %arg2: memref<1x8x32xbf16, #tpu.memory_space<vmem>>, %arg3: memref<1x8x32xbf16, #tpu.memory_space<vmem>>, %arg4: memref<1x1x8xf32, #tpu.memory_space<vmem>>, %arg5: memref<1x8x32xbf16, #tpu.memory_space<vmem>>) attributes {dimension_semantics = [#tpu.dimension_semantics<parallel>], iteration_bounds = array<i64: 2>, scalar_prefetch = 0 : i64, scratch_operands = 0 : i64, tpu.core_type = #tpu.core_type<tc>, window_params = [{transform_indices = @transform_0, window_bounds = array<i64: 1, 8, 32>}, {transform_indices = @transform_1, window_bounds = array<i64: 1, 8, 32>}, {transform_indices = @transform_2, window_bounds = array<i64: 1, 8, 32>}, {transform_indices = @transform_3, window_bounds = array<i64: 1, 1, 8>}, {transform_indices = @transform_4, window_bounds = array<i64: 1, 8, 32>}]} {
    %c0 = arith.constant 0 : index
    %c0_0 = arith.constant 0 : index
    %c0_1 = arith.constant 0 : index
    %0 = vector.load %arg1[%c0, %c0_0, %c0_1] : memref<1x8x32xbf16, #tpu.memory_space<vmem>>, vector<1x8x32xbf16>
    %1 = vector.shape_cast %0 : vector<1x8x32xbf16> to vector<8x32xbf16>
    %c0_2 = arith.constant 0 : index
    %c0_3 = arith.constant 0 : index
    %c0_4 = arith.constant 0 : index
    %2 = vector.load %arg2[%c0_2, %c0_3, %c0_4] : memref<1x8x32xbf16, #tpu.memory_space<vmem>>, vector<1x8x32xbf16>
    %3 = vector.shape_cast %2 : vector<1x8x32xbf16> to vector<8x32xbf16>
    %c0_5 = arith.constant 0 : index
    %c0_6 = arith.constant 0 : index
    %c0_7 = arith.constant 0 : index
    %4 = vector.load %arg3[%c0_5, %c0_6, %c0_7] : memref<1x8x32xbf16, #tpu.memory_space<vmem>>, vector<1x8x32xbf16>
    %5 = vector.shape_cast %4 : vector<1x8x32xbf16> to vector<8x32xbf16>
    %c0_8 = arith.constant 0 : index
    %c0_9 = arith.constant 0 : index
    %c0_10 = arith.constant 0 : index
    %6 = vector.load %arg4[%c0_8, %c0_9, %c0_10] : memref<1x1x8xf32, #tpu.memory_space<vmem>>, vector<1x1x8xf32>
    %7 = vector.shape_cast %6 : vector<1x1x8xf32> to vector<1x8xf32>
    %cst = arith.constant 1.000000e+00 : f32
    %8 = vector.broadcast %cst : f32 to vector<1x8xf32>
    %9 = arith.subf %8, %7 : vector<1x8xf32>
    %cst_11 = arith.constant -1.000000e+09 : f32
    %10 = vector.broadcast %cst_11 : f32 to vector<1x8xf32>
    %11 = arith.mulf %9, %10 : vector<1x8xf32>
    %12 = vector.extract_strided_slice %1 {offsets = [0, 0], sizes = [8, 8], strides = [1, 1]} : vector<8x32xbf16> to vector<8x8xbf16>
    %13 = vector.extract_strided_slice %3 {offsets = [0, 0], sizes = [8, 8], strides = [1, 1]} : vector<8x32xbf16> to vector<8x8xbf16>
    %14 = vector.extract_strided_slice %5 {offsets = [0, 0], sizes = [8, 8], strides = [1, 1]} : vector<8x32xbf16> to vector<8x8xbf16>
    %15 = tpu.transpose %13, [1, 0] : vector<8x8xbf16> -> vector<8x8xbf16>
    %cst_12 = arith.constant dense<0.000000e+00> : vector<8x8xf32>
    %16 = tpu.matmul %12, %15, %cst_12 {dimension_numbers = #tpu.dot_dimension_numbers<[1], [0], [0], [1], [0, 0, 1, 1], [], []>} : vector<8x8xbf16>, vector<8x8xbf16>, vector<8x8xf32> -> vector<8x8xf32>
    %cst_13 = arith.constant 0.353553385 : f32
    %17 = vector.broadcast %cst_13 : f32 to vector<8x8xf32>
    %18 = arith.mulf %16, %17 : vector<8x8xf32>
    %19 = vector.broadcast %11 : vector<1x8xf32> to vector<8x8xf32>
    %20 = arith.addf %18, %19 : vector<8x8xf32>
    %cst_14 = arith.constant dense<0xFF800000> : vector<8xf32>
    %21 = vector.multi_reduction <maximumf>, %20, %cst_14 [1] : vector<8x8xf32> to vector<8xf32>
    %22 = vector.shape_cast %21 : vector<8xf32> to vector<8x1xf32>
    %23 = vector.broadcast %22 : vector<8x1xf32> to vector<8x8xf32>
    %24 = arith.subf %20, %23 : vector<8x8xf32>
    %25 = math.exp %24 : vector<8x8xf32>
    %cst_15 = arith.constant dense<0.000000e+00> : vector<8xf32>
    %26 = vector.multi_reduction <add>, %25, %cst_15 [1] : vector<8x8xf32> to vector<8xf32>
    %27 = vector.shape_cast %26 : vector<8xf32> to vector<8x1xf32>
    %28 = tpu.reciprocal %27 {approx = true} : vector<8x1xf32> -> vector<8x1xf32>
    %29 = vector.broadcast %28 : vector<8x1xf32> to vector<8x8xf32>
    %30 = arith.mulf %25, %29 : vector<8x8xf32>
    %31 = arith.truncf %30 : vector<8x8xf32> to vector<8x8xbf16>
    %cst_16 = arith.constant dense<0.000000e+00> : vector<8x8xf32>
    %32 = tpu.matmul %31, %14, %cst_16 {dimension_numbers = #tpu.dot_dimension_numbers<[1], [0], [0], [1], [0, 0, 1, 1], [], []>} : vector<8x8xbf16>, vector<8x8xbf16>, vector<8x8xf32> -> vector<8x8xf32>
    %33 = vector.extract_strided_slice %1 {offsets = [0, 8], sizes = [8, 8], strides = [1, 1]} : vector<8x32xbf16> to vector<8x8xbf16>
    %34 = vector.extract_strided_slice %3 {offsets = [0, 8], sizes = [8, 8], strides = [1, 1]} : vector<8x32xbf16> to vector<8x8xbf16>
    %35 = vector.extract_strided_slice %5 {offsets = [0, 8], sizes = [8, 8], strides = [1, 1]} : vector<8x32xbf16> to vector<8x8xbf16>
    %36 = tpu.transpose %34, [1, 0] : vector<8x8xbf16> -> vector<8x8xbf16>
    %cst_17 = arith.constant dense<0.000000e+00> : vector<8x8xf32>
    %37 = tpu.matmul %33, %36, %cst_17 {dimension_numbers = #tpu.dot_dimension_numbers<[1], [0], [0], [1], [0, 0, 1, 1], [], []>} : vector<8x8xbf16>, vector<8x8xbf16>, vector<8x8xf32> -> vector<8x8xf32>
    %cst_18 = arith.constant 0.353553385 : f32
    %38 = vector.broadcast %cst_18 : f32 to vector<8x8xf32>
    %39 = arith.mulf %37, %38 : vector<8x8xf32>
    %40 = vector.broadcast %11 : vector<1x8xf32> to vector<8x8xf32>
    %41 = arith.addf %39, %40 : vector<8x8xf32>
    %cst_19 = arith.constant dense<0xFF800000> : vector<8xf32>
    %42 = vector.multi_reduction <maximumf>, %41, %cst_19 [1] : vector<8x8xf32> to vector<8xf32>
    %43 = vector.shape_cast %42 : vector<8xf32> to vector<8x1xf32>
    %44 = vector.broadcast %43 : vector<8x1xf32> to vector<8x8xf32>
    %45 = arith.subf %41, %44 : vector<8x8xf32>
    %46 = math.exp %45 : vector<8x8xf32>
    %cst_20 = arith.constant dense<0.000000e+00> : vector<8xf32>
    %47 = vector.multi_reduction <add>, %46, %cst_20 [1] : vector<8x8xf32> to vector<8xf32>
    %48 = vector.shape_cast %47 : vector<8xf32> to vector<8x1xf32>
    %49 = tpu.reciprocal %48 {approx = true} : vector<8x1xf32> -> vector<8x1xf32>
    %50 = vector.broadcast %49 : vector<8x1xf32> to vector<8x8xf32>
    %51 = arith.mulf %46, %50 : vector<8x8xf32>
    %52 = arith.truncf %51 : vector<8x8xf32> to vector<8x8xbf16>
    %cst_21 = arith.constant dense<0.000000e+00> : vector<8x8xf32>
    %53 = tpu.matmul %52, %35, %cst_21 {dimension_numbers = #tpu.dot_dimension_numbers<[1], [0], [0], [1], [0, 0, 1, 1], [], []>} : vector<8x8xbf16>, vector<8x8xbf16>, vector<8x8xf32> -> vector<8x8xf32>
    %54 = vector.extract_strided_slice %1 {offsets = [0, 16], sizes = [8, 8], strides = [1, 1]} : vector<8x32xbf16> to vector<8x8xbf16>
    %55 = vector.extract_strided_slice %3 {offsets = [0, 16], sizes = [8, 8], strides = [1, 1]} : vector<8x32xbf16> to vector<8x8xbf16>
    %56 = vector.extract_strided_slice %5 {offsets = [0, 16], sizes = [8, 8], strides = [1, 1]} : vector<8x32xbf16> to vector<8x8xbf16>
    %57 = tpu.transpose %55, [1, 0] : vector<8x8xbf16> -> vector<8x8xbf16>
    %cst_22 = arith.constant dense<0.000000e+00> : vector<8x8xf32>
    %58 = tpu.matmul %54, %57, %cst_22 {dimension_numbers = #tpu.dot_dimension_numbers<[1], [0], [0], [1], [0, 0, 1, 1], [], []>} : vector<8x8xbf16>, vector<8x8xbf16>, vector<8x8xf32> -> vector<8x8xf32>
    %cst_23 = arith.constant 0.353553385 : f32
    %59 = vector.broadcast %cst_23 : f32 to vector<8x8xf32>
    %60 = arith.mulf %58, %59 : vector<8x8xf32>
    %61 = vector.broadcast %11 : vector<1x8xf32> to vector<8x8xf32>
    %62 = arith.addf %60, %61 : vector<8x8xf32>
    %cst_24 = arith.constant dense<0xFF800000> : vector<8xf32>
    %63 = vector.multi_reduction <maximumf>, %62, %cst_24 [1] : vector<8x8xf32> to vector<8xf32>
    %64 = vector.shape_cast %63 : vector<8xf32> to vector<8x1xf32>
    %65 = vector.broadcast %64 : vector<8x1xf32> to vector<8x8xf32>
    %66 = arith.subf %62, %65 : vector<8x8xf32>
    %67 = math.exp %66 : vector<8x8xf32>
    %cst_25 = arith.constant dense<0.000000e+00> : vector<8xf32>
    %68 = vector.multi_reduction <add>, %67, %cst_25 [1] : vector<8x8xf32> to vector<8xf32>
    %69 = vector.shape_cast %68 : vector<8xf32> to vector<8x1xf32>
    %70 = tpu.reciprocal %69 {approx = true} : vector<8x1xf32> -> vector<8x1xf32>
    %71 = vector.broadcast %70 : vector<8x1xf32> to vector<8x8xf32>
    %72 = arith.mulf %67, %71 : vector<8x8xf32>
    %73 = arith.truncf %72 : vector<8x8xf32> to vector<8x8xbf16>
    %cst_26 = arith.constant dense<0.000000e+00> : vector<8x8xf32>
    %74 = tpu.matmul %73, %56, %cst_26 {dimension_numbers = #tpu.dot_dimension_numbers<[1], [0], [0], [1], [0, 0, 1, 1], [], []>} : vector<8x8xbf16>, vector<8x8xbf16>, vector<8x8xf32> -> vector<8x8xf32>
    %75 = vector.extract_strided_slice %1 {offsets = [0, 24], sizes = [8, 8], strides = [1, 1]} : vector<8x32xbf16> to vector<8x8xbf16>
    %76 = vector.extract_strided_slice %3 {offsets = [0, 24], sizes = [8, 8], strides = [1, 1]} : vector<8x32xbf16> to vector<8x8xbf16>
    %77 = vector.extract_strided_slice %5 {offsets = [0, 24], sizes = [8, 8], strides = [1, 1]} : vector<8x32xbf16> to vector<8x8xbf16>
    %78 = tpu.transpose %76, [1, 0] : vector<8x8xbf16> -> vector<8x8xbf16>
    %cst_27 = arith.constant dense<0.000000e+00> : vector<8x8xf32>
    %79 = tpu.matmul %75, %78, %cst_27 {dimension_numbers = #tpu.dot_dimension_numbers<[1], [0], [0], [1], [0, 0, 1, 1], [], []>} : vector<8x8xbf16>, vector<8x8xbf16>, vector<8x8xf32> -> vector<8x8xf32>
    %cst_28 = arith.constant 0.353553385 : f32
    %80 = vector.broadcast %cst_28 : f32 to vector<8x8xf32>
    %81 = arith.mulf %79, %80 : vector<8x8xf32>
    %82 = vector.broadcast %11 : vector<1x8xf32> to vector<8x8xf32>
    %83 = arith.addf %81, %82 : vector<8x8xf32>
    %cst_29 = arith.constant dense<0xFF800000> : vector<8xf32>
    %84 = vector.multi_reduction <maximumf>, %83, %cst_29 [1] : vector<8x8xf32> to vector<8xf32>
    %85 = vector.shape_cast %84 : vector<8xf32> to vector<8x1xf32>
    %86 = vector.broadcast %85 : vector<8x1xf32> to vector<8x8xf32>
    %87 = arith.subf %83, %86 : vector<8x8xf32>
    %88 = math.exp %87 : vector<8x8xf32>
    %cst_30 = arith.constant dense<0.000000e+00> : vector<8xf32>
    %89 = vector.multi_reduction <add>, %88, %cst_30 [1] : vector<8x8xf32> to vector<8xf32>
    %90 = vector.shape_cast %89 : vector<8xf32> to vector<8x1xf32>
    %91 = tpu.reciprocal %90 {approx = true} : vector<8x1xf32> -> vector<8x1xf32>
    %92 = vector.broadcast %91 : vector<8x1xf32> to vector<8x8xf32>
    %93 = arith.mulf %88, %92 : vector<8x8xf32>
    %94 = arith.truncf %93 : vector<8x8xf32> to vector<8x8xbf16>
    %cst_31 = arith.constant dense<0.000000e+00> : vector<8x8xf32>
    %95 = tpu.matmul %94, %77, %cst_31 {dimension_numbers = #tpu.dot_dimension_numbers<[1], [0], [0], [1], [0, 0, 1, 1], [], []>} : vector<8x8xbf16>, vector<8x8xbf16>, vector<8x8xf32> -> vector<8x8xf32>
    %96 = tpu.concatenate %32, %53, %74, %95 in 1 : vector<8x8xf32>, vector<8x8xf32>, vector<8x8xf32>, vector<8x8xf32> -> vector<8x32xf32>
    %97 = arith.truncf %96 : vector<8x32xf32> to vector<8x32xbf16>
    %c0_32 = arith.constant 0 : index
    %c0_33 = arith.constant 0 : index
    %c0_34 = arith.constant 0 : index
    %98 = vector.load %arg5[%c0_32, %c0_33, %c0_34] : memref<1x8x32xbf16, #tpu.memory_space<vmem>>, vector<1x8x32xbf16>
    %99 = vector.shape_cast %98 : vector<1x8x32xbf16> to vector<8x32xbf16>
    %100 = vector.shape_cast %97 : vector<8x32xbf16> to vector<1x8x32xbf16>
    tpu.vector_store %arg5[%c0_32, %c0_33, %c0_34], %100 {strides = array<i32>} : memref<1x8x32xbf16, #tpu.memory_space<vmem>>, vector<1x8x32xbf16>,
    return
  }
  func.func @transform_0(%arg0: i32) -> (i32, i32, i32) {
    %c0_i32 = arith.constant 0 : i32
    %c0_i32_0 = arith.constant 0 : i32
    %c0_i32_1 = arith.constant 0 : i32
    return %arg0, %c0_i32, %c0_i32_0 : i32, i32, i32
  }
  func.func @transform_1(%arg0: i32) -> (i32, i32, i32) {
    %c0_i32 = arith.constant 0 : i32
    %c0_i32_0 = arith.constant 0 : i32
    %c0_i32_1 = arith.constant 0 : i32
    return %arg0, %c0_i32, %c0_i32_0 : i32, i32, i32
  }
  func.func @transform_2(%arg0: i32) -> (i32, i32, i32) {
    %c0_i32 = arith.constant 0 : i32
    %c0_i32_0 = arith.constant 0 : i32
    %c0_i32_1 = arith.constant 0 : i32
    return %arg0, %c0_i32, %c0_i32_0 : i32, i32, i32
  }
  func.func @transform_3(%arg0: i32) -> (i32, i32, i32) {
    %c0_i32 = arith.constant 0 : i32
    %c0_i32_0 = arith.constant 0 : i32
    %c0_i32_1 = arith.constant 0 : i32
    return %arg0, %c0_i32, %c0_i32_0 : i32, i32, i32
  }
  func.func @transform_4(%arg0: i32) -> (i32, i32, i32) {
    %c0_i32 = arith.constant 0 : i32
    %c0_i32_0 = arith.constant 0 : i32
    %c0_i32_1 = arith.constant 0 : i32
    return %arg0, %c0_i32, %c0_i32_0 : i32, i32, i32
  }
}

module attributes {stable_mosaic.version = 11 : i64} {
  func.func @_dense_add_ln_kernel(%arg0: i32, %arg1: i32, %arg2: memref<16x64xbf16, #tpu.memory_space<vmem>>, %arg3: memref<64x32xbf16, #tpu.memory_space<vmem>>, %arg4: memref<1x32xf32, #tpu.memory_space<vmem>>, %arg5: memref<16x32xbf16, #tpu.memory_space<vmem>>, %arg6: memref<1x32xf32, #tpu.memory_space<vmem>>, %arg7: memref<1x32xf32, #tpu.memory_space<vmem>>, %arg8: memref<16x32xbf16, #tpu.memory_space<vmem>>, %arg9: memref<16x32xf32, #tpu.memory_space<vmem>>) attributes {dimension_semantics = [#tpu.dimension_semantics<parallel>, #tpu.dimension_semantics<arbitrary>], iteration_bounds = array<i64: 1, 1>, scalar_prefetch = 0 : i64, scratch_operands = 1 : i64, tpu.core_type = #tpu.core_type<tc>, window_params = [{transform_indices = @transform_0, window_bounds = array<i64: 16, 64>}, {transform_indices = @transform_1, window_bounds = array<i64: 64, 32>}, {pipeline_mode = #tpu.pipeline_mode<synchronous>, transform_indices = @transform_2, window_bounds = array<i64: 1, 32>}, {transform_indices = @transform_3, window_bounds = array<i64: 16, 32>}, {pipeline_mode = #tpu.pipeline_mode<synchronous>, transform_indices = @transform_4, window_bounds = array<i64: 1, 32>}, {pipeline_mode = #tpu.pipeline_mode<synchronous>, transform_indices = @transform_5, window_bounds = array<i64: 1, 32>}, {transform_indices = @transform_6, window_bounds = array<i64: 16, 32>}]} {
    %c0_i32 = arith.constant 0 : i32
    %0 = arith.cmpi eq, %arg1, %c0_i32 : i32
    %1 = arith.extui %0 : i1 to i32
    %c0_i32_0 = arith.constant 0 : i32
    %2 = arith.cmpi ne, %1, %c0_i32_0 : i32
    scf.if %2 {
      %cst_10 = arith.constant 0.000000e+00 : f32
      %12 = vector.broadcast %cst_10 : f32 to vector<16x32xf32>
      %c0_11 = arith.constant 0 : index
      %c0_12 = arith.constant 0 : index
      %13 = vector.load %arg9[%c0_11, %c0_12] : memref<16x32xf32, #tpu.memory_space<vmem>>, vector<16x32xf32>
      tpu.vector_store %arg9[%c0_11, %c0_12], %12 {strides = array<i32>} : memref<16x32xf32, #tpu.memory_space<vmem>>, vector<16x32xf32>,
    } else {
    }
    %c0 = arith.constant 0 : index
    %c0_1 = arith.constant 0 : index
    %3 = vector.load %arg9[%c0, %c0_1] : memref<16x32xf32, #tpu.memory_space<vmem>>, vector<16x32xf32>
    %c0_2 = arith.constant 0 : index
    %c0_3 = arith.constant 0 : index
    %4 = vector.load %arg2[%c0_2, %c0_3] : memref<16x64xbf16, #tpu.memory_space<vmem>>, vector<16x64xbf16>
    %c0_4 = arith.constant 0 : index
    %c0_5 = arith.constant 0 : index
    %5 = vector.load %arg3[%c0_4, %c0_5] : memref<64x32xbf16, #tpu.memory_space<vmem>>, vector<64x32xbf16>
    %cst = arith.constant dense<0.000000e+00> : vector<16x32xf32>
    %6 = tpu.matmul %4, %5, %cst {dimension_numbers = #tpu.dot_dimension_numbers<[1], [0], [0], [1], [0, 0, 1, 1], [], []>} : vector<16x64xbf16>, vector<64x32xbf16>, vector<16x32xf32> -> vector<16x32xf32>
    %7 = arith.addf %3, %6 : vector<16x32xf32>
    %c0_6 = arith.constant 0 : index
    %c0_7 = arith.constant 0 : index
    %8 = vector.load %arg9[%c0_6, %c0_7] : memref<16x32xf32, #tpu.memory_space<vmem>>, vector<16x32xf32>
    tpu.vector_store %arg9[%c0_6, %c0_7], %7 {strides = array<i32>} : memref<16x32xf32, #tpu.memory_space<vmem>>, vector<16x32xf32>,
    %c0_i32_8 = arith.constant 0 : i32
    %9 = arith.cmpi eq, %arg1, %c0_i32_8 : i32
    %10 = arith.extui %9 : i1 to i32
    %c0_i32_9 = arith.constant 0 : i32
    %11 = arith.cmpi ne, %10, %c0_i32_9 : i32
    scf.if %11 {
      %c0_10 = arith.constant 0 : index
      %c0_11 = arith.constant 0 : index
      %12 = vector.load %arg9[%c0_10, %c0_11] : memref<16x32xf32, #tpu.memory_space<vmem>>, vector<16x32xf32>
      %c0_12 = arith.constant 0 : index
      %c0_13 = arith.constant 0 : index
      %13 = vector.load %arg4[%c0_12, %c0_13] : memref<1x32xf32, #tpu.memory_space<vmem>>, vector<1x32xf32>
      %14 = vector.broadcast %13 : vector<1x32xf32> to vector<16x32xf32>
      %15 = arith.addf %12, %14 : vector<16x32xf32>
      %c0_14 = arith.constant 0 : index
      %c0_15 = arith.constant 0 : index
      %16 = vector.load %arg5[%c0_14, %c0_15] : memref<16x32xbf16, #tpu.memory_space<vmem>>, vector<16x32xbf16>
      %17 = arith.extf %16 : vector<16x32xbf16> to vector<16x32xf32>
      %18 = arith.addf %15, %17 : vector<16x32xf32>
      %cst_16 = arith.constant dense<0.000000e+00> : vector<16xf32>
      %19 = vector.multi_reduction <add>, %18, %cst_16 [1] : vector<16x32xf32> to vector<16xf32>
      %20 = vector.shape_cast %19 : vector<16xf32> to vector<16x1xf32>
      %cst_17 = arith.constant 3.200000e+01 : f32
      %21 = vector.broadcast %cst_17 : f32 to vector<16x1xf32>
      %22 = arith.divf %20, %21 : vector<16x1xf32>
      %23 = vector.broadcast %22 : vector<16x1xf32> to vector<16x32xf32>
      %24 = arith.subf %18, %23 : vector<16x32xf32>
      %25 = arith.mulf %24, %24 : vector<16x32xf32>
      %cst_18 = arith.constant dense<0.000000e+00> : vector<16xf32>
      %26 = vector.multi_reduction <add>, %25, %cst_18 [1] : vector<16x32xf32> to vector<16xf32>
      %27 = vector.shape_cast %26 : vector<16xf32> to vector<16x1xf32>
      %cst_19 = arith.constant 3.200000e+01 : f32
      %28 = vector.broadcast %cst_19 : f32 to vector<16x1xf32>
      %29 = arith.divf %27, %28 : vector<16x1xf32>
      %30 = vector.broadcast %22 : vector<16x1xf32> to vector<16x32xf32>
      %31 = arith.subf %18, %30 : vector<16x32xf32>
      %cst_20 = arith.constant 9.99999996E-13 : f32
      %32 = vector.broadcast %cst_20 : f32 to vector<16x1xf32>
      %33 = arith.addf %29, %32 : vector<16x1xf32>
      %34 = math.rsqrt %33 : vector<16x1xf32>
      %35 = vector.broadcast %34 : vector<16x1xf32> to vector<16x32xf32>
      %36 = arith.mulf %31, %35 : vector<16x32xf32>
      %c0_21 = arith.constant 0 : index
      %c0_22 = arith.constant 0 : index
      %37 = vector.load %arg6[%c0_21, %c0_22] : memref<1x32xf32, #tpu.memory_space<vmem>>, vector<1x32xf32>
      %38 = vector.broadcast %37 : vector<1x32xf32> to vector<16x32xf32>
      %39 = arith.mulf %36, %38 : vector<16x32xf32>
      %c0_23 = arith.constant 0 : index
      %c0_24 = arith.constant 0 : index
      %40 = vector.load %arg7[%c0_23, %c0_24] : memref<1x32xf32, #tpu.memory_space<vmem>>, vector<1x32xf32>
      %41 = vector.broadcast %40 : vector<1x32xf32> to vector<16x32xf32>
      %42 = arith.addf %39, %41 : vector<16x32xf32>
      %43 = arith.truncf %42 : vector<16x32xf32> to vector<16x32xbf16>
      %c0_25 = arith.constant 0 : index
      %c0_26 = arith.constant 0 : index
      %44 = vector.load %arg8[%c0_25, %c0_26] : memref<16x32xbf16, #tpu.memory_space<vmem>>, vector<16x32xbf16>
      tpu.vector_store %arg8[%c0_25, %c0_26], %43 {strides = array<i32>} : memref<16x32xbf16, #tpu.memory_space<vmem>>, vector<16x32xbf16>,
    } else {
    }
    return
  }
  func.func @transform_0(%arg0: i32, %arg1: i32) -> (i32, i32) {
    %c0_i32 = arith.constant 0 : i32
    return %arg0, %arg1 : i32, i32
  }
  func.func @transform_1(%arg0: i32, %arg1: i32) -> (i32, i32) {
    %c0_i32 = arith.constant 0 : i32
    %c0_i32_0 = arith.constant 0 : i32
    return %arg1, %c0_i32 : i32, i32
  }
  func.func @transform_2(%arg0: i32, %arg1: i32) -> (i32, i32) {
    %c0_i32 = arith.constant 0 : i32
    %c0_i32_0 = arith.constant 0 : i32
    %c0_i32_1 = arith.constant 0 : i32
    return %c0_i32, %c0_i32_0 : i32, i32
  }
  func.func @transform_3(%arg0: i32, %arg1: i32) -> (i32, i32) {
    %c0_i32 = arith.constant 0 : i32
    %c0_i32_0 = arith.constant 0 : i32
    return %arg0, %c0_i32 : i32, i32
  }
  func.func @transform_4(%arg0: i32, %arg1: i32) -> (i32, i32) {
    %c0_i32 = arith.constant 0 : i32
    %c0_i32_0 = arith.constant 0 : i32
    %c0_i32_1 = arith.constant 0 : i32
    return %c0_i32, %c0_i32_0 : i32, i32
  }
  func.func @transform_5(%arg0: i32, %arg1: i32) -> (i32, i32) {
    %c0_i32 = arith.constant 0 : i32
    %c0_i32_0 = arith.constant 0 : i32
    %c0_i32_1 = arith.constant 0 : i32
    return %c0_i32, %c0_i32_0 : i32, i32
  }
  func.func @transform_6(%arg0: i32, %arg1: i32) -> (i32, i32) {
    %c0_i32 = arith.constant 0 : i32
    %c0_i32_0 = arith.constant 0 : i32
    return %arg0, %c0_i32 : i32, i32
  }
}

module attributes {stable_mosaic.version = 11 : i64} {
  func.func @_dense_kernel(%arg0: i32, %arg1: i32, %arg2: i32, %arg3: memref<16x32xbf16, #tpu.memory_space<vmem>>, %arg4: memref<32x128xbf16, #tpu.memory_space<vmem>>, %arg5: memref<1x128xf32, #tpu.memory_space<vmem>>, %arg6: memref<16x128xf32, #tpu.memory_space<vmem>>, %arg7: memref<16x128xf32, #tpu.memory_space<vmem>>) attributes {dimension_semantics = [#tpu.dimension_semantics<parallel>, #tpu.dimension_semantics<parallel>, #tpu.dimension_semantics<arbitrary>], iteration_bounds = array<i64: 1, 1, 1>, scalar_prefetch = 0 : i64, scratch_operands = 1 : i64, tpu.core_type = #tpu.core_type<tc>, window_params = [{transform_indices = @transform_0, window_bounds = array<i64: 16, 32>}, {transform_indices = @transform_1, window_bounds = array<i64: 32, 128>}, {transform_indices = @transform_2, window_bounds = array<i64: 1, 128>}, {transform_indices = @transform_3, window_bounds = array<i64: 16, 128>}]} {
    %c0_i32 = arith.constant 0 : i32
    %0 = arith.cmpi eq, %arg2, %c0_i32 : i32
    %1 = arith.extui %0 : i1 to i32
    %c0_i32_0 = arith.constant 0 : i32
    %2 = arith.cmpi ne, %1, %c0_i32_0 : i32
    scf.if %2 {
      %cst_10 = arith.constant 0.000000e+00 : f32
      %12 = vector.broadcast %cst_10 : f32 to vector<16x128xf32>
      %c0_11 = arith.constant 0 : index
      %c0_12 = arith.constant 0 : index
      %13 = vector.load %arg7[%c0_11, %c0_12] : memref<16x128xf32, #tpu.memory_space<vmem>>, vector<16x128xf32>
      tpu.vector_store %arg7[%c0_11, %c0_12], %12 {strides = array<i32>} : memref<16x128xf32, #tpu.memory_space<vmem>>, vector<16x128xf32>,
    } else {
    }
    %c0 = arith.constant 0 : index
    %c0_1 = arith.constant 0 : index
    %3 = vector.load %arg7[%c0, %c0_1] : memref<16x128xf32, #tpu.memory_space<vmem>>, vector<16x128xf32>
    %c0_2 = arith.constant 0 : index
    %c0_3 = arith.constant 0 : index
    %4 = vector.load %arg3[%c0_2, %c0_3] : memref<16x32xbf16, #tpu.memory_space<vmem>>, vector<16x32xbf16>
    %c0_4 = arith.constant 0 : index
    %c0_5 = arith.constant 0 : index
    %5 = vector.load %arg4[%c0_4, %c0_5] : memref<32x128xbf16, #tpu.memory_space<vmem>>, vector<32x128xbf16>
    %cst = arith.constant dense<0.000000e+00> : vector<16x128xf32>
    %6 = tpu.matmul %4, %5, %cst {dimension_numbers = #tpu.dot_dimension_numbers<[1], [0], [0], [1], [0, 0, 1, 1], [], []>} : vector<16x32xbf16>, vector<32x128xbf16>, vector<16x128xf32> -> vector<16x128xf32>
    %7 = arith.addf %3, %6 : vector<16x128xf32>
    %c0_6 = arith.constant 0 : index
    %c0_7 = arith.constant 0 : index
    %8 = vector.load %arg7[%c0_6, %c0_7] : memref<16x128xf32, #tpu.memory_space<vmem>>, vector<16x128xf32>
    tpu.vector_store %arg7[%c0_6, %c0_7], %7 {strides = array<i32>} : memref<16x128xf32, #tpu.memory_space<vmem>>, vector<16x128xf32>,
    %c0_i32_8 = arith.constant 0 : i32
    %9 = arith.cmpi eq, %arg2, %c0_i32_8 : i32
    %10 = arith.extui %9 : i1 to i32
    %c0_i32_9 = arith.constant 0 : i32
    %11 = arith.cmpi ne, %10, %c0_i32_9 : i32
    scf.if %11 {
      %c0_10 = arith.constant 0 : index
      %c0_11 = arith.constant 0 : index
      %12 = vector.load %arg7[%c0_10, %c0_11] : memref<16x128xf32, #tpu.memory_space<vmem>>, vector<16x128xf32>
      %c0_12 = arith.constant 0 : index
      %c0_13 = arith.constant 0 : index
      %13 = vector.load %arg5[%c0_12, %c0_13] : memref<1x128xf32, #tpu.memory_space<vmem>>, vector<1x128xf32>
      %14 = vector.broadcast %13 : vector<1x128xf32> to vector<16x128xf32>
      %15 = arith.addf %12, %14 : vector<16x128xf32>
      %c0_14 = arith.constant 0 : index
      %c0_15 = arith.constant 0 : index
      %16 = vector.load %arg6[%c0_14, %c0_15] : memref<16x128xf32, #tpu.memory_space<vmem>>, vector<16x128xf32>
      tpu.vector_store %arg6[%c0_14, %c0_15], %15 {strides = array<i32>} : memref<16x128xf32, #tpu.memory_space<vmem>>, vector<16x128xf32>,
    } else {
    }
    return
  }
  func.func @transform_0(%arg0: i32, %arg1: i32, %arg2: i32) -> (i32, i32) {
    %c0_i32 = arith.constant 0 : i32
    return %arg0, %arg2 : i32, i32
  }
  func.func @transform_1(%arg0: i32, %arg1: i32, %arg2: i32) -> (i32, i32) {
    %c0_i32 = arith.constant 0 : i32
    return %arg2, %arg1 : i32, i32
  }
  func.func @transform_2(%arg0: i32, %arg1: i32, %arg2: i32) -> (i32, i32) {
    %c0_i32 = arith.constant 0 : i32
    %c0_i32_0 = arith.constant 0 : i32
    return %c0_i32, %arg1 : i32, i32
  }
  func.func @transform_3(%arg0: i32, %arg1: i32, %arg2: i32) -> (i32, i32) {
    %c0_i32 = arith.constant 0 : i32
    return %arg0, %arg1 : i32, i32
  }
}

module attributes {stable_mosaic.version = 11 : i64} {
  func.func @_dense_kernel(%arg0: i32, %arg1: i32, %arg2: i32, %arg3: memref<16x32xbf16, #tpu.memory_space<vmem>>, %arg4: memref<32x64xbf16, #tpu.memory_space<vmem>>, %arg5: memref<1x64xf32, #tpu.memory_space<vmem>>, %arg6: memref<16x64xbf16, #tpu.memory_space<vmem>>, %arg7: memref<16x64xf32, #tpu.memory_space<vmem>>) attributes {dimension_semantics = [#tpu.dimension_semantics<parallel>, #tpu.dimension_semantics<parallel>, #tpu.dimension_semantics<arbitrary>], iteration_bounds = array<i64: 1, 1, 1>, scalar_prefetch = 0 : i64, scratch_operands = 1 : i64, tpu.core_type = #tpu.core_type<tc>, window_params = [{transform_indices = @transform_0, window_bounds = array<i64: 16, 32>}, {transform_indices = @transform_1, window_bounds = array<i64: 32, 64>}, {transform_indices = @transform_2, window_bounds = array<i64: 1, 64>}, {transform_indices = @transform_3, window_bounds = array<i64: 16, 64>}]} {
    %c0_i32 = arith.constant 0 : i32
    %0 = arith.cmpi eq, %arg2, %c0_i32 : i32
    %1 = arith.extui %0 : i1 to i32
    %c0_i32_0 = arith.constant 0 : i32
    %2 = arith.cmpi ne, %1, %c0_i32_0 : i32
    scf.if %2 {
      %cst_10 = arith.constant 0.000000e+00 : f32
      %12 = vector.broadcast %cst_10 : f32 to vector<16x64xf32>
      %c0_11 = arith.constant 0 : index
      %c0_12 = arith.constant 0 : index
      %13 = vector.load %arg7[%c0_11, %c0_12] : memref<16x64xf32, #tpu.memory_space<vmem>>, vector<16x64xf32>
      tpu.vector_store %arg7[%c0_11, %c0_12], %12 {strides = array<i32>} : memref<16x64xf32, #tpu.memory_space<vmem>>, vector<16x64xf32>,
    } else {
    }
    %c0 = arith.constant 0 : index
    %c0_1 = arith.constant 0 : index
    %3 = vector.load %arg7[%c0, %c0_1] : memref<16x64xf32, #tpu.memory_space<vmem>>, vector<16x64xf32>
    %c0_2 = arith.constant 0 : index
    %c0_3 = arith.constant 0 : index
    %4 = vector.load %arg3[%c0_2, %c0_3] : memref<16x32xbf16, #tpu.memory_space<vmem>>, vector<16x32xbf16>
    %c0_4 = arith.constant 0 : index
    %c0_5 = arith.constant 0 : index
    %5 = vector.load %arg4[%c0_4, %c0_5] : memref<32x64xbf16, #tpu.memory_space<vmem>>, vector<32x64xbf16>
    %cst = arith.constant dense<0.000000e+00> : vector<16x64xf32>
    %6 = tpu.matmul %4, %5, %cst {dimension_numbers = #tpu.dot_dimension_numbers<[1], [0], [0], [1], [0, 0, 1, 1], [], []>} : vector<16x32xbf16>, vector<32x64xbf16>, vector<16x64xf32> -> vector<16x64xf32>
    %7 = arith.addf %3, %6 : vector<16x64xf32>
    %c0_6 = arith.constant 0 : index
    %c0_7 = arith.constant 0 : index
    %8 = vector.load %arg7[%c0_6, %c0_7] : memref<16x64xf32, #tpu.memory_space<vmem>>, vector<16x64xf32>
    tpu.vector_store %arg7[%c0_6, %c0_7], %7 {strides = array<i32>} : memref<16x64xf32, #tpu.memory_space<vmem>>, vector<16x64xf32>,
    %c0_i32_8 = arith.constant 0 : i32
    %9 = arith.cmpi eq, %arg2, %c0_i32_8 : i32
    %10 = arith.extui %9 : i1 to i32
    %c0_i32_9 = arith.constant 0 : i32
    %11 = arith.cmpi ne, %10, %c0_i32_9 : i32
    scf.if %11 {
      %c0_10 = arith.constant 0 : index
      %c0_11 = arith.constant 0 : index
      %12 = vector.load %arg7[%c0_10, %c0_11] : memref<16x64xf32, #tpu.memory_space<vmem>>, vector<16x64xf32>
      %c0_12 = arith.constant 0 : index
      %c0_13 = arith.constant 0 : index
      %13 = vector.load %arg5[%c0_12, %c0_13] : memref<1x64xf32, #tpu.memory_space<vmem>>, vector<1x64xf32>
      %14 = vector.broadcast %13 : vector<1x64xf32> to vector<16x64xf32>
      %15 = arith.addf %12, %14 : vector<16x64xf32>
      %16 = arith.mulf %15, %15 : vector<16x64xf32>
      %17 = arith.mulf %15, %16 : vector<16x64xf32>
      %cst_14 = arith.constant 4.471500e-02 : f32
      %18 = vector.broadcast %cst_14 : f32 to vector<16x64xf32>
      %19 = arith.mulf %18, %17 : vector<16x64xf32>
      %20 = arith.addf %15, %19 : vector<16x64xf32>
      %cst_15 = arith.constant 0.797884583 : f32
      %21 = vector.broadcast %cst_15 : f32 to vector<16x64xf32>
      %22 = arith.mulf %21, %20 : vector<16x64xf32>
      %23 = math.tanh %22 : vector<16x64xf32>
      %cst_16 = arith.constant 1.000000e+00 : f32
      %24 = vector.broadcast %cst_16 : f32 to vector<16x64xf32>
      %25 = arith.addf %24, %23 : vector<16x64xf32>
      %cst_17 = arith.constant 5.000000e-01 : f32
      %26 = vector.broadcast %cst_17 : f32 to vector<16x64xf32>
      %27 = arith.mulf %26, %25 : vector<16x64xf32>
      %28 = arith.mulf %15, %27 : vector<16x64xf32>
      %29 = arith.truncf %28 : vector<16x64xf32> to vector<16x64xbf16>
      %c0_18 = arith.constant 0 : index
      %c0_19 = arith.constant 0 : index
      %30 = vector.load %arg6[%c0_18, %c0_19] : memref<16x64xbf16, #tpu.memory_space<vmem>>, vector<16x64xbf16>
      tpu.vector_store %arg6[%c0_18, %c0_19], %29 {strides = array<i32>} : memref<16x64xbf16, #tpu.memory_space<vmem>>, vector<16x64xbf16>,
    } else {
    }
    return
  }
  func.func @transform_0(%arg0: i32, %arg1: i32, %arg2: i32) -> (i32, i32) {
    %c0_i32 = arith.constant 0 : i32
    return %arg0, %arg2 : i32, i32
  }
  func.func @transform_1(%arg0: i32, %arg1: i32, %arg2: i32) -> (i32, i32) {
    %c0_i32 = arith.constant 0 : i32
    return %arg2, %arg1 : i32, i32
  }
  func.func @transform_2(%arg0: i32, %arg1: i32, %arg2: i32) -> (i32, i32) {
    %c0_i32 = arith.constant 0 : i32
    %c0_i32_0 = arith.constant 0 : i32
    return %c0_i32, %arg1 : i32, i32
  }
  func.func @transform_3(%arg0: i32, %arg1: i32, %arg2: i32) -> (i32, i32) {
    %c0_i32 = arith.constant 0 : i32
    return %arg0, %arg1 : i32, i32
  }
}

</mosaic_0001>

<llo_original>
// kernel: bert_forward.13
$region0: #{bert_forward.13}
  #allocation0 [shape = 'u32[]', space=smem, size = 0x4, offset = 0x4, fixed_abs, tag = 'smem constant byte address 0x4 - core index']
  #allocation1 [shape = 'u32[144,128]{1,0:T(1,128)}', space=vmem, size = 0x12000, scoped, tag = 'internal scratch']
  #allocation2 [shape = 'f32[16,96]{1,0:T(8,128)}', space=vmem, size = 0x2000, scoped, tag = 'scratch operand']
  %s0 = inlined_call_operand.vmem [shape: bf16[16,32], index: 0, kind: input, shape index: {}]
  %s1 = inlined_call_operand.vmem [shape: bf16[32,96], index: 1, kind: input, shape index: {}]
  %s2 = inlined_call_operand.vmem [shape: f32[1,96], index: 2, kind: input, shape index: {}]
  %s3 = inlined_call_operand.vmem [shape: bf16[16,96], index: 3, kind: output, shape index: {}]
  %s4 = sld [smem:[#allocation0]]
  $region30: #{bert_forward.13} parent=0
    _
  %s6 = ssub.s32 1, %s4
  %s7 = scalar_select 0, %s6, %s4
  // Predicated region
  $region2: #{bert_forward.13} parent=0 // pred_check
    _
  $region3: #{bert_forward.13} parent=0 // pred_check_branch
    %9 = sbr.rel (0) target = $region5
  $region4: #{bert_forward.13} parent=0 // pred_region
    _
  $region5: #{bert_forward.13} parent=0 // pred_fallthru
    _
  // Predicated region
  $region6: #{bert_forward.13} parent=0 // pred_check
    _
  $region7: #{bert_forward.13} parent=0 // pred_check_branch
    %11 = sbr.rel (0) target = $region9
  $region8: #{bert_forward.13} parent=0 // pred_region
    _
  $region9: #{bert_forward.13} parent=0 // pred_fallthru
    _
  // Predicated region
  $region10: #{bert_forward.13} parent=0 // pred_check
    _
  $region11: #{bert_forward.13} parent=0 // pred_check_branch
    %13 = sbr.rel (0) target = $region13
  $region12: #{bert_forward.13} parent=0 // pred_region
    _
  $region13: #{bert_forward.13} parent=0 // pred_fallthru
    _
  %p15 = scmp.eq.s32.totalorder 0, 0
  // Predicated region
  $region14: #{bert_forward.13} parent=0 // pred_check
    %p16 = pneg %p15
  $region15: #{bert_forward.13} parent=0 // pred_check_branch
    %18 = sbr.rel (%p16) target = $region17
  $region16: #{bert_forward.13} parent=0 // pred_region
    %vm19 = vcmask 785408
    %20 = vst.msk [vmem:[#allocation2] sm:$0xff] %vm19, 0.0
    %21 = vst.msk [vmem:[#allocation2 + $0x8] sm:$0xff] %vm19, 0.0
  $region17: #{bert_forward.13} parent=0 // pred_fallthru
    _
  %v22 = vld [vmem:[#allocation2] sm:$0xff]
  %v23 = vld [vmem:[#allocation2 + $0x8] sm:$0xff]
  %v24 = vld [vmem:[%s0] sm:$0xf]
  %v25 = vld [vmem:[%s0 + $0x4] sm:$0xf]
  %v26 = vld [vmem:[%s1] sm:$0xf]
  %v27 = vld [vmem:[%s1 + $0x4] sm:$0xf]
  %v28 = vld [vmem:[%s1 + $0x8] sm:$0xf]
  %v29 = vld [vmem:[%s1 + $0xc] sm:$0xf]
  %v32 = vunpack.c.l.b16 %v24
  %v33 = vunpack.c.l.b16 %v25
  %v34 = vpack.c.b16 %v33, %v32
  %v39 = vunpack.c.l.b16 %v26
  %v40 = vunpack.c.l.b16 %v27
  %v41 = vunpack.c.l.b16 %v28
  %v42 = vunpack.c.l.b16 %v29
  %v43 = vpack.c.b16 %v40, %v39
  %v44 = vpack.c.b16 %v42, %v41
  %vm47 = vcmask 261120
  %v49 = vsel %vm47, %v34, 0
  %51 = vmatprep.subr.bf16.mxu0 0
  %52 = vmatpush1.bf16.msra.mxu0 %v43
  %53 = vmatprep.subr.bf16.mxu0 0
  %54 = vmatpush1.bf16.msra.mxu0 %v44
  %55 = vmatprep.subr.bf16.mxu0 0
  %56 = vmatpush1.bf16.msra.mxu0 0
  %57 = vmatprep.subr.bf16.mxu0 0
  %58 = vmatpush1.bf16.msra.mxu0 0
  %59 = vmatprep.subr.bf16.mxu0 0
  %60 = vmatpush1.bf16.msra.mxu0 0
  %61 = vmatprep.subr.bf16.mxu0 0
  %62 = vmatpush1.bf16.msra.mxu0 0
  %63 = vmatprep.subr.bf16.mxu0 0
  %64 = vmatpush1.bf16.msra.mxu0 0
  %65 = vmatprep.subr.bf16.mxu0 0
  %66 = vmatpush1.bf16.msra.mxu0 0
  %67 = vmatprep.subr.bf16.mxu0 0
  %68 = vmatpush1.bf16.msra.mxu0 0
  %69 = vmatprep.subr.bf16.mxu0 0
  %70 = vmatpush1.bf16.msra.mxu0 0
  %71 = vmatprep.subr.bf16.mxu0 0
  %72 = vmatpush1.bf16.msra.mxu0 0
  %73 = vmatprep.subr.bf16.mxu0 0
  %74 = vmatpush1.bf16.msra.mxu0 0
  %75 = vmatprep.subr.bf16.mxu0 0
  %76 = vmatpush1.bf16.msra.mxu0 0
  %77 = vmatprep.subr.bf16.mxu0 0
  %78 = vmatpush1.bf16.msra.mxu0 0
  %79 = vmatprep.subr.bf16.mxu0 0
  %80 = vmatpush1.bf16.msra.mxu0 0
  %81 = vmatprep.subr.bf16.mxu0 0
  %82 = vmatpush1.bf16.msra.mxu0 0
  %83 = vmatprep.mubr.bf16.mxu0 0
  %84 = vmatmul.mubr.bf16.gmra.mrb[0].mxu0 %v49
  %v85 = vpop.f32.mrb[0].mxu0
  %v86 = vadd.f32 0.0, %v85
  %v87 = vpop.f32.mrb[0].mxu0
  %v88 = vpop.f32.mrb[0].mxu0
  %v89 = vadd.f32 0.0, %v88
  %v90 = vpop.f32.mrb[0].mxu0
  %91 = vdwg.mxu0
  %v92 = vadd.f32 %v22, %v86
  %v93 = vadd.f32 %v23, %v89
  %vm94 = vcmask 785408
  %95 = vst.msk [vmem:[#allocation2] sm:$0xff] %vm94, %v92
  %96 = vst.msk [vmem:[#allocation2 + $0x8] sm:$0xff] %vm94, %v93
  // Predicated region
  $region18: #{bert_forward.13} parent=0 // pred_check
    %p97 = pneg %p15
  $region19: #{bert_forward.13} parent=0 // pred_check_branch
    %99 = sbr.rel (%p97) target = $region21
  $region20: #{bert_forward.13} parent=0 // pred_region
    %v100 = vld [vmem:[#allocation2] sm:$0xff]
    %v101 = vld [vmem:[#allocation2 + $0x8] sm:$0xff]
    %v102 = vld [vmem:[%s2] sm:$0x1]
    %v104 = vlaneseq
    %v105 = vshrl.u32 %v104, 7
    %v106 = vsub.s32 0, %v105
    %v107 = vrot.slane %v102, %v106
    %v109 = vadd.f32 %v100, %v107
    %v110 = vadd.f32 %v101, %v107
    %v111 = vpack.c.bf16 %v110, %v109
    %v113 = vunpack.c.l.b16 %v111
    %v114 = vunpack.c.h.b16 %v111
    %v115 = vpack.c.b16 %v113, %v113
    %v116 = vpack.c.b16 %v114, %v114
    %vm119 = vcmask 781312
    %120 = vst.msk [vmem:[%s3] sm:$0xf] %vm119, %v115
    %121 = vst.msk [vmem:[%s3 + $0x4] sm:$0xf] %vm119, %v116
  $region21: #{bert_forward.13} parent=0 // pred_fallthru
    _
  // Predicated region
  $region22: #{bert_forward.13} parent=0 // pred_check
    _
  $region23: #{bert_forward.13} parent=0 // pred_check_branch
    %123 = sbr.rel (0) target = $region25
  $region24: #{bert_forward.13} parent=0 // pred_region
    _
  $region25: #{bert_forward.13} parent=0 // pred_fallthru
    _
  // Predicated region
  $region26: #{bert_forward.13} parent=0 // pred_check
    _
  $region27: #{bert_forward.13} parent=0 // pred_check_branch
    %125 = sbr.rel (0) target = $region29
  $region28: #{bert_forward.13} parent=0 // pred_region
    _
  $region29: #{bert_forward.13} parent=0 // pred_fallthru
    _

// kernel: bert_forward.12
$region0: #{bert_forward.12}
  #allocation0 [shape = 'u32[]', space=smem, size = 0x4, offset = 0x4, fixed_abs, tag = 'smem constant byte address 0x4 - core index']
  #allocation1 [shape = 'u32[144,128]{1,0:T(1,128)}', space=vmem, size = 0x12000, scoped, tag = 'internal scratch']
  %s0 = inlined_call_operand.vmem [shape: f32[16,32], index: 0, kind: input, shape index: {}]
  %s1 = inlined_call_operand.vmem [shape: f32[16,32], index: 1, kind: input, shape index: {}]
  %s2 = inlined_call_operand.vmem [shape: f32[1,32], index: 2, kind: input, shape index: {}]
  %s3 = inlined_call_operand.vmem [shape: f32[1,32], index: 3, kind: input, shape index: {}]
  %s4 = inlined_call_operand.vmem [shape: bf16[16,32], index: 4, kind: output, shape index: {}]
  %s5 = sld [smem:[#allocation0]]
  $region26: #{bert_forward.12} parent=0
    _
  %s7 = ssub.s32 1, %s5
  %s8 = scalar_select 0, %s7, %s5
  // Predicated region
  $region2: #{bert_forward.12} parent=0 // pred_check
    _
  $region3: #{bert_forward.12} parent=0 // pred_check_branch
    %10 = sbr.rel (0) target = $region5
  $region4: #{bert_forward.12} parent=0 // pred_region
    _
  $region5: #{bert_forward.12} parent=0 // pred_fallthru
    _
  // Predicated region
  $region6: #{bert_forward.12} parent=0 // pred_check
    _
  $region7: #{bert_forward.12} parent=0 // pred_check_branch
    %12 = sbr.rel (0) target = $region9
  $region8: #{bert_forward.12} parent=0 // pred_region
    _
  $region9: #{bert_forward.12} parent=0 // pred_fallthru
    _
  // Predicated region
  $region10: #{bert_forward.12} parent=0 // pred_check
    _
  $region11: #{bert_forward.12} parent=0 // pred_check_branch
    %14 = sbr.rel (0) target = $region13
  $region12: #{bert_forward.12} parent=0 // pred_region
    _
  $region13: #{bert_forward.12} parent=0 // pred_fallthru
    _
  // Predicated region
  $region14: #{bert_forward.12} parent=0 // pred_check
    _
  $region15: #{bert_forward.12} parent=0 // pred_check_branch
    %16 = sbr.rel (0) target = $region17
  $region16: #{bert_forward.12} parent=0 // pred_region
    _
  $region17: #{bert_forward.12} parent=0 // pred_fallthru
    _
  %v17 = vld [vmem:[%s0] sm:$0xff]
  %v18 = vld [vmem:[%s0 + $0x8] sm:$0xff]
  %v19 = vld [vmem:[%s1] sm:$0xff]
  %v20 = vld [vmem:[%s1 + $0x8] sm:$0xff]
  %v21 = vadd.f32 %v17, %v19
  %v22 = vadd.f32 %v18, %v20
  %vm23 = vcmask 261120
  %v24 = vsel %vm23, %v21, 0.0
  %25 = vadd.xlane.f32.xlu0 %v24
  %v26 = vpop.xlane.xlu0 %25
  %v27 = vsel %vm23, %v22, 0.0
  %28 = vadd.xlane.f32.xlu0 %v27
  %v29 = vpop.xlane.xlu0 %28
  %v30 = vrcp.pop 32.0
  %v31 = vmul.f32 %v26, %v30
  %v32 = vmul.f32 %v29, %v30
  %v33 = vsub.f32 %v21, %v31
  %v34 = vsub.f32 %v22, %v32
  %v35 = vmul.f32 %v33, %v33
  %v36 = vmul.f32 %v34, %v34
  %v37 = vsel %vm23, %v35, 0.0
  %38 = vadd.xlane.f32.xlu0 %v37
  %v39 = vpop.xlane.xlu0 %38
  %v40 = vsel %vm23, %v36, 0.0
  %41 = vadd.xlane.f32.xlu0 %v40
  %v42 = vpop.xlane.xlu0 %41
  %v43 = vmul.f32 %v39, %v30
  %v44 = vmul.f32 %v42, %v30
  %v45 = vadd.f32 %v43, 1e-12
  %v46 = vadd.f32 %v44, 1e-12
  %v47 = vrsqrt.pop %v45
  %v48 = vrsqrt.pop %v46
  %v49 = vmul.f32 %v33, %v47
  %v50 = vmul.f32 %v34, %v48
  %v51 = vld [vmem:[%s2] sm:$0x1]
  %v53 = vlaneseq
  %v54 = vshrl.u32 %v53, 7
  %v55 = vsub.s32 0, %v54
  %v56 = vrot.slane %v51, %v55
  %v58 = vmul.f32 %v49, %v56
  %v59 = vmul.f32 %v50, %v56
  %v60 = vld [vmem:[%s3] sm:$0x1]
  %v62 = vlaneseq
  %v63 = vshrl.u32 %v62, 7
  %v64 = vsub.s32 0, %v63
  %v65 = vrot.slane %v60, %v64
  %v67 = vadd.f32 %v58, %v65
  %v68 = vadd.f32 %v59, %v65
  %v69 = vpack.c.bf16 %v68, %v67
  %v71 = vunpack.c.l.b16 %v69
  %v72 = vunpack.c.h.b16 %v69
  %v73 = vpack.c.b16 %v71, %v71
  %v74 = vpack.c.b16 %v72, %v72
  %vm77 = vcmask 257024
  %78 = vst.msk [vmem:[%s4] sm:$0xf] %vm77, %v73
  %79 = vst.msk [vmem:[%s4 + $0x4] sm:$0xf] %vm77, %v74
  // Predicated region
  $region18: #{bert_forward.12} parent=0 // pred_check
    _
  $region19: #{bert_forward.12} parent=0 // pred_check_branch
    %81 = sbr.rel (0) target = $region21
  $region20: #{bert_forward.12} parent=0 // pred_region
    _
  $region21: #{bert_forward.12} parent=0 // pred_fallthru
    _
  // Predicated region
  $region22: #{bert_forward.12} parent=0 // pred_check
    _
  $region23: #{bert_forward.12} parent=0 // pred_check_branch
    %83 = sbr.rel (0) target = $region25
  $region24: #{bert_forward.12} parent=0 // pred_region
    _
  $region25: #{bert_forward.12} parent=0 // pred_fallthru
    _

// kernel: bert_forward.15
$region0: #{bert_forward.15}
  #allocation0 [shape = 'u32[]', space=smem, size = 0x4, offset = 0x4, fixed_abs, tag = 'smem constant byte address 0x4 - core index']
  #allocation1 [shape = 'u32[144,128]{1,0:T(1,128)}', space=vmem, size = 0x12000, scoped, tag = 'internal scratch']
  #allocation2 [shape = 'f32[16,32]{1,0:T(8,128)}', space=vmem, size = 0x2000, scoped, tag = 'scratch operand']
  %s0 = inlined_call_operand.vmem [shape: bf16[16,32], index: 0, kind: input, shape index: {}]
  %s1 = inlined_call_operand.vmem [shape: bf16[32,32], index: 1, kind: input, shape index: {}]
  %s2 = inlined_call_operand.vmem [shape: f32[1,32], index: 2, kind: input, shape index: {}]
  %s3 = inlined_call_operand.vmem [shape: bf16[16,32], index: 3, kind: input, shape index: {}]
  %s4 = inlined_call_operand.vmem [shape: f32[1,32], index: 4, kind: input, shape index: {}]
  %s5 = inlined_call_operand.vmem [shape: f32[1,32], index: 5, kind: input, shape index: {}]
  %s6 = inlined_call_operand.vmem [shape: bf16[16,32], index: 6, kind: output, shape index: {}]
  %s7 = sld [smem:[#allocation0]]
  $region42: #{bert_forward.15} parent=0
    _
  %s9 = ssub.s32 1, %s7
  %s10 = scalar_select 0, %s9, %s7
  // Predicated region
  $region2: #{bert_forward.15} parent=0 // pred_check
    _
  $region3: #{bert_forward.15} parent=0 // pred_check_branch
    %12 = sbr.rel (0) target = $region5
  $region4: #{bert_forward.15} parent=0 // pred_region
    _
  $region5: #{bert_forward.15} parent=0 // pred_fallthru
    _
  // Predicated region
  $region6: #{bert_forward.15} parent=0 // pred_check
    _
  $region7: #{bert_forward.15} parent=0 // pred_check_branch
    %14 = sbr.rel (0) target = $region9
  $region8: #{bert_forward.15} parent=0 // pred_region
    _
  $region9: #{bert_forward.15} parent=0 // pred_fallthru
    _
  // Predicated region
  $region10: #{bert_forward.15} parent=0 // pred_check
    _
  $region11: #{bert_forward.15} parent=0 // pred_check_branch
    %16 = sbr.rel (0) target = $region13
  $region12: #{bert_forward.15} parent=0 // pred_region
    _
  $region13: #{bert_forward.15} parent=0 // pred_fallthru
    _
  // Predicated region
  $region14: #{bert_forward.15} parent=0 // pred_check
    _
  $region15: #{bert_forward.15} parent=0 // pred_check_branch
    %18 = sbr.rel (0) target = $region17
  $region16: #{bert_forward.15} parent=0 // pred_region
    _
  $region17: #{bert_forward.15} parent=0 // pred_fallthru
    _
  // Predicated region
  $region18: #{bert_forward.15} parent=0 // pred_check
    _
  $region19: #{bert_forward.15} parent=0 // pred_check_branch
    %20 = sbr.rel (0) target = $region21
  $region20: #{bert_forward.15} parent=0 // pred_region
    _
  $region21: #{bert_forward.15} parent=0 // pred_fallthru
    _
  // Predicated region
  $region22: #{bert_forward.15} parent=0 // pred_check
    _
  $region23: #{bert_forward.15} parent=0 // pred_check_branch
    %22 = sbr.rel (0) target = $region25
  $region24: #{bert_forward.15} parent=0 // pred_region
    _
  $region25: #{bert_forward.15} parent=0 // pred_fallthru
    _
  %p24 = scmp.eq.s32.totalorder 0, 0
  // Predicated region
  $region26: #{bert_forward.15} parent=0 // pred_check
    %p25 = pneg %p24
  $region27: #{bert_forward.15} parent=0 // pred_check_branch
    %27 = sbr.rel (%p25) target = $region29
  $region28: #{bert_forward.15} parent=0 // pred_region
    %vm28 = vcmask 261120
    %29 = vst.msk [vmem:[#allocation2] sm:$0xff] %vm28, 0.0
    %30 = vst.msk [vmem:[#allocation2 + $0x8] sm:$0xff] %vm28, 0.0
  $region29: #{bert_forward.15} parent=0 // pred_fallthru
    _
  %v31 = vld [vmem:[#allocation2] sm:$0xff]
  %v32 = vld [vmem:[#allocation2 + $0x8] sm:$0xff]
  %v33 = vld [vmem:[%s0] sm:$0xf]
  %v34 = vld [vmem:[%s0 + $0x4] sm:$0xf]
  %v35 = vld [vmem:[%s1] sm:$0xf]
  %v36 = vld [vmem:[%s1 + $0x4] sm:$0xf]
  %v37 = vld [vmem:[%s1 + $0x8] sm:$0xf]
  %v38 = vld [vmem:[%s1 + $0xc] sm:$0xf]
  %v41 = vunpack.c.l.b16 %v33
  %v42 = vunpack.c.l.b16 %v34
  %v43 = vpack.c.b16 %v42, %v41
  %v48 = vunpack.c.l.b16 %v35
  %v49 = vunpack.c.l.b16 %v36
  %v50 = vunpack.c.l.b16 %v37
  %v51 = vunpack.c.l.b16 %v38
  %v52 = vpack.c.b16 %v49, %v48
  %v53 = vpack.c.b16 %v51, %v50
  %vm56 = vcmask 261120
  %v58 = vsel %vm56, %v43, 0
  %60 = vmatprep.subr.bf16.mxu0 0
  %61 = vmatpush1.bf16.msra.mxu0 %v52
  %62 = vmatprep.subr.bf16.mxu0 0
  %63 = vmatpush1.bf16.msra.mxu0 %v53
  %64 = vmatprep.subr.bf16.mxu0 0
  %65 = vmatpush1.bf16.msra.mxu0 0
  %66 = vmatprep.subr.bf16.mxu0 0
  %67 = vmatpush1.bf16.msra.mxu0 0
  %68 = vmatprep.subr.bf16.mxu0 0
  %69 = vmatpush1.bf16.msra.mxu0 0
  %70 = vmatprep.subr.bf16.mxu0 0
  %71 = vmatpush1.bf16.msra.mxu0 0
  %72 = vmatprep.subr.bf16.mxu0 0
  %73 = vmatpush1.bf16.msra.mxu0 0
  %74 = vmatprep.subr.bf16.mxu0 0
  %75 = vmatpush1.bf16.msra.mxu0 0
  %76 = vmatprep.subr.bf16.mxu0 0
  %77 = vmatpush1.bf16.msra.mxu0 0
  %78 = vmatprep.subr.bf16.mxu0 0
  %79 = vmatpush1.bf16.msra.mxu0 0
  %80 = vmatprep.subr.bf16.mxu0 0
  %81 = vmatpush1.bf16.msra.mxu0 0
  %82 = vmatprep.subr.bf16.mxu0 0
  %83 = vmatpush1.bf16.msra.mxu0 0
  %84 = vmatprep.subr.bf16.mxu0 0
  %85 = vmatpush1.bf16.msra.mxu0 0
  %86 = vmatprep.subr.bf16.mxu0 0
  %87 = vmatpush1.bf16.msra.mxu0 0
  %88 = vmatprep.subr.bf16.mxu0 0
  %89 = vmatpush1.bf16.msra.mxu0 0
  %90 = vmatprep.subr.bf16.mxu0 0
  %91 = vmatpush1.bf16.msra.mxu0 0
  %92 = vmatprep.mubr.bf16.mxu0 0
  %93 = vmatmul.mubr.bf16.gmra.mrb[0].mxu0 %v58
  %v94 = vpop.f32.mrb[0].mxu0
  %v95 = vadd.f32 0.0, %v94
  %v96 = vpop.f32.mrb[0].mxu0
  %v97 = vpop.f32.mrb[0].mxu0
  %v98 = vadd.f32 0.0, %v97
  %v99 = vpop.f32.mrb[0].mxu0
  %100 = vdwg.mxu0
  %v101 = vadd.f32 %v31, %v95
  %v102 = vadd.f32 %v32, %v98
  %103 = vst.msk [vmem:[#allocation2] sm:$0xff] %vm56, %v101
  %104 = vst.msk [vmem:[#allocation2 + $0x8] sm:$0xff] %vm56, %v102
  // Predicated region
  $region30: #{bert_forward.15} parent=0 // pred_check
    %p105 = pneg %p24
  $region31: #{bert_forward.15} parent=0 // pred_check_branch
    %107 = sbr.rel (%p105) target = $region33
  $region32: #{bert_forward.15} parent=0 // pred_region
    %v108 = vld [vmem:[#allocation2] sm:$0xff]
    %v109 = vld [vmem:[#allocation2 + $0x8] sm:$0xff]
    %v110 = vld [vmem:[%s2] sm:$0x1]
    %v112 = vlaneseq
    %v113 = vshrl.u32 %v112, 7
    %v114 = vsub.s32 0, %v113
    %v115 = vrot.slane %v110, %v114
    %v117 = vadd.f32 %v108, %v115
    %v118 = vadd.f32 %v109, %v115
    %v119 = vld [vmem:[%s3] sm:$0xf]
    %v120 = vld [vmem:[%s3 + $0x4] sm:$0xf]
    %v121 = vunpack.c.l.bf16 %v119
    %v122 = vunpack.c.l.bf16 %v120
    %v123 = vadd.f32 %v117, %v121
    %v124 = vadd.f32 %v118, %v122
    %v125 = vsel %vm56, %v123, 0.0
    %126 = vadd.xlane.f32.xlu0 %v125
    %v127 = vpop.xlane.xlu0 %126
    %v128 = vsel %vm56, %v124, 0.0
    %129 = vadd.xlane.f32.xlu0 %v128
    %v130 = vpop.xlane.xlu0 %129
    %v131 = vrcp.pop 32.0
    %v132 = vmul.f32 %v127, %v131
    %v133 = vmul.f32 %v130, %v131
    %v134 = vsub.f32 %v123, %v132
    %v135 = vsub.f32 %v124, %v133
    %v136 = vmul.f32 %v134, %v134
    %v137 = vmul.f32 %v135, %v135
    %v138 = vsel %vm56, %v136, 0.0
    %139 = vadd.xlane.f32.xlu0 %v138
    %v140 = vpop.xlane.xlu0 %139
    %v141 = vsel %vm56, %v137, 0.0
    %142 = vadd.xlane.f32.xlu0 %v141
    %v143 = vpop.xlane.xlu0 %142
    %v144 = vmul.f32 %v140, %v131
    %v145 = vmul.f32 %v143, %v131
    %v146 = vadd.f32 %v144, 1e-12
    %v147 = vadd.f32 %v145, 1e-12
    %v148 = vrsqrt.pop %v146
    %v149 = vrsqrt.pop %v147
    %v150 = vmul.f32 %v134, %v148
    %v151 = vmul.f32 %v135, %v149
    %v152 = vld [vmem:[%s4] sm:$0x1]
    %v154 = vlaneseq
    %v155 = vshrl.u32 %v154, 7
    %v156 = vsub.s32 0, %v155
    %v157 = vrot.slane %v152, %v156
    %v159 = vmul.f32 %v150, %v157
    %v160 = vmul.f32 %v151, %v157
    %v161 = vld [vmem:[%s5] sm:$0x1]
    %v163 = vlaneseq
    %v164 = vshrl.u32 %v163, 7
    %v165 = vsub.s32 0, %v164
    %v166 = vrot.slane %v161, %v165
    %v168 = vadd.f32 %v159, %v166
    %v169 = vadd.f32 %v160, %v166
    %v170 = vpack.c.bf16 %v169, %v168
    %v172 = vunpack.c.l.b16 %v170
    %v173 = vunpack.c.h.b16 %v170
    %v174 = vpack.c.b16 %v172, %v172
    %v175 = vpack.c.b16 %v173, %v173
    %vm178 = vcmask 257024
    %179 = vst.msk [vmem:[%s6] sm:$0xf] %vm178, %v174
    %180 = vst.msk [vmem:[%s6 + $0x4] sm:$0xf] %vm178, %v175
  $region33: #{bert_forward.15} parent=0 // pred_fallthru
    _
  // Predicated region
  $region34: #{bert_forward.15} parent=0 // pred_check
    _
  $region35: #{bert_forward.15} parent=0 // pred_check_branch
    %182 = sbr.rel (0) target = $region37
  $region36: #{bert_forward.15} parent=0 // pred_region
    _
  $region37: #{bert_forward.15} parent=0 // pred_fallthru
    _
  // Predicated region
  $region38: #{bert_forward.15} parent=0 // pred_check
    _
  $region39: #{bert_forward.15} parent=0 // pred_check_branch
    %184 = sbr.rel (0) target = $region41
  $region40: #{bert_forward.15} parent=0 // pred_region
    _
  $region41: #{bert_forward.15} parent=0 // pred_fallthru
    _

// kernel: bert_forward.14
$region0: #{bert_forward.14}
  #allocation0 [shape = 'u32[]', space=smem, size = 0x4, offset = 0x4, fixed_abs, tag = 'smem constant byte address 0x4 - core index']
  #allocation1 [shape = 'u32[144,128]{1,0:T(1,128)}', space=vmem, size = 0x12000, scoped, tag = 'internal scratch']
  %s0 = inlined_call_operand.vmem [shape: bf16[2,8,32], index: 0, kind: input, shape index: {}]
  %s1 = inlined_call_operand.vmem [shape: bf16[2,8,32], index: 1, kind: input, shape index: {}]
  %s2 = inlined_call_operand.vmem [shape: bf16[2,8,32], index: 2, kind: input, shape index: {}]
  %s3 = inlined_call_operand.vmem [shape: f32[2,1,8], index: 3, kind: input, shape index: {}]
  %s4 = inlined_call_operand.vmem [shape: bf16[2,8,32], index: 4, kind: output, shape index: {}]
  %s5 = sld [smem:[#allocation0]]
  $region49: #{bert_forward.14} parent=0
    _
  %s7 = ssub.s32 1, %s5
  %s8 = scalar_select 0, %s7, %s5
  loop: start=0, step=1, limit=4
  $region2: #{bert_forward.14} parent=0 // loop_pre_header
    _
  $region3: #{bert_forward.14} parent=0 // loop_header
    %s10 = sphi 0, %s14
    %p11 = scmp.ge.s32.totalorder %s10, 4
    %s20 = sphi 0, %s22
    %s23 = sphi 0, %s20
    %s24 = sphi 0, %s23
    %s40 = sphi 0, %s24
    %s46 = sphi 0, %s48
    %s49 = sphi 0, %s46
    %s50 = sphi 0, %s49
    %s66 = sphi 0, %s50
    %s72 = sphi 0, %s74
    %s75 = sphi 0, %s72
    %s76 = sphi 0, %s75
    %s92 = sphi 0, %s76
    %s98 = sphi 0, %s100
    %s101 = sphi 0, %s98
    %s102 = sphi 0, %s101
    %s118 = sphi 0, %s102
    %s124 = sphi 0, %s126
    %s127 = sphi 0, %s124
    %s128 = sphi 0, %s127
    %s144 = sphi 0, %s128
  $region4: #{bert_forward.14} parent=0 // loop_header_branch
    %13 = sbr.rel (%p11) target = $region8
  $region5: #{bert_forward.14} parent=0 // loop_body
    %s15 = ssub.s32 %s10, 1
    %s16 = ssub.s32 %s10, 2
    %s17 = sadd.s32 %s10, 1
    %s18 = ssub.s32 %s10, %s17
    %p19 = scmp.eq.s32.totalorder %s18, 0
    %s21 = sadd.s32 %s20, 1
    %s22 = scalar_select %p19, %s20, %s21
    %p25 = pneg %p19
    %p26 = scmp.eq.s32.totalorder %s10, 1
    %p27 = por %p25, %p26
    %p28 = scmp.ne.s32.totalorder %s20, %s23
    %p29 = scmp.eq.s32.totalorder %s10, 0
    %p30 = por %p28, %p29
    %p31 = scmp.ne.s32.totalorder %s20, %s23
    %p32 = scmp.eq.s32.totalorder %s15, 1
    %p33 = por %p31, %p32
    %p34 = scmp.ne.s32.totalorder %s23, %s24
    %p35 = scmp.eq.s32.totalorder %s15, 0
    %p36 = por %p34, %p35
    %p37 = scmp.ne.s32.totalorder %s23, %s24
    %p38 = scmp.eq.s32.totalorder %s16, 1
    %p39 = por %p37, %p38
    %p41 = scmp.ne.s32.totalorder %s24, %s40
    %p42 = scmp.eq.s32.totalorder %s16, 0
    %p43 = por %p41, %p42
    %s44 = ssub.s32 %s10, %s17
    %p45 = scmp.eq.s32.totalorder %s44, 0
    %s47 = sadd.s32 %s46, 1
    %s48 = scalar_select %p45, %s46, %s47
    %p51 = pneg %p45
    %p52 = scmp.eq.s32.totalorder %s10, 1
    %p53 = por %p51, %p52
    %p54 = scmp.ne.s32.totalorder %s46, %s49
    %p55 = scmp.eq.s32.totalorder %s10, 0
    %p56 = por %p54, %p55
    %p57 = scmp.ne.s32.totalorder %s46, %s49
    %p58 = scmp.eq.s32.totalorder %s15, 1
    %p59 = por %p57, %p58
    %p60 = scmp.ne.s32.totalorder %s49, %s50
    %p61 = scmp.eq.s32.totalorder %s15, 0
    %p62 = por %p60, %p61
    %p63 = scmp.ne.s32.totalorder %s49, %s50
    %p64 = scmp.eq.s32.totalorder %s16, 1
    %p65 = por %p63, %p64
    %p67 = scmp.ne.s32.totalorder %s50, %s66
    %p68 = scmp.eq.s32.totalorder %s16, 0
    %p69 = por %p67, %p68
    %s70 = ssub.s32 %s10, %s17
    %p71 = scmp.eq.s32.totalorder %s70, 0
    %s73 = sadd.s32 %s72, 1
    %s74 = scalar_select %p71, %s72, %s73
    %p77 = pneg %p71
    %p78 = scmp.eq.s32.totalorder %s10, 1
    %p79 = por %p77, %p78
    %p80 = scmp.ne.s32.totalorder %s72, %s75
    %p81 = scmp.eq.s32.totalorder %s10, 0
    %p82 = por %p80, %p81
    %p83 = scmp.ne.s32.totalorder %s72, %s75
    %p84 = scmp.eq.s32.totalorder %s15, 1
    %p85 = por %p83, %p84
    %p86 = scmp.ne.s32.totalorder %s75, %s76
    %p87 = scmp.eq.s32.totalorder %s15, 0
    %p88 = por %p86, %p87
    %p89 = scmp.ne.s32.totalorder %s75, %s76
    %p90 = scmp.eq.s32.totalorder %s16, 1
    %p91 = por %p89, %p90
    %p93 = scmp.ne.s32.totalorder %s76, %s92
    %p94 = scmp.eq.s32.totalorder %s16, 0
    %p95 = por %p93, %p94
    %s96 = ssub.s32 %s10, %s17
    %p97 = scmp.eq.s32.totalorder %s96, 0
    %s99 = sadd.s32 %s98, 1
    %s100 = scalar_select %p97, %s98, %s99
    %p103 = pneg %p97
    %p104 = scmp.eq.s32.totalorder %s10, 1
    %p105 = por %p103, %p104
    %p106 = scmp.ne.s32.totalorder %s98, %s101
    %p107 = scmp.eq.s32.totalorder %s10, 0
    %p108 = por %p106, %p107
    %p109 = scmp.ne.s32.totalorder %s98, %s101
    %p110 = scmp.eq.s32.totalorder %s15, 1
    %p111 = por %p109, %p110
    %p112 = scmp.ne.s32.totalorder %s101, %s102
    %p113 = scmp.eq.s32.totalorder %s15, 0
    %p114 = por %p112, %p113
    %p115 = scmp.ne.s32.totalorder %s101, %s102
    %p116 = scmp.eq.s32.totalorder %s16, 1
    %p117 = por %p115, %p116
    %p119 = scmp.ne.s32.totalorder %s102, %s118
    %p120 = scmp.eq.s32.totalorder %s16, 0
    %p121 = por %p119, %p120
    %s122 = ssub.s32 %s10, %s17
    %p123 = scmp.eq.s32.totalorder %s122, 0
    %s125 = sadd.s32 %s124, 1
    %s126 = scalar_select %p123, %s124, %s125
    %p129 = pneg %p123
    %p130 = scmp.eq.s32.totalorder %s10, 1
    %p131 = por %p129, %p130
    %p132 = scmp.ne.s32.totalorder %s124, %s127
    %p133 = scmp.eq.s32.totalorder %s10, 0
    %p134 = por %p132, %p133
    %p135 = scmp.ne.s32.totalorder %s124, %s127
    %p136 = scmp.eq.s32.totalorder %s15, 1
    %p137 = por %p135, %p136
    %p138 = scmp.ne.s32.totalorder %s127, %s128
    %p139 = scmp.eq.s32.totalorder %s15, 0
    %p140 = por %p138, %p139
    %p141 = scmp.ne.s32.totalorder %s127, %s128
    %p142 = scmp.eq.s32.totalorder %s16, 1
    %p143 = por %p141, %p142
    %p145 = scmp.ne.s32.totalorder %s128, %s144
    %p146 = scmp.eq.s32.totalorder %s16, 0
    %p147 = por %p145, %p146
    %p148 = scmp.le.s32.totalorder 1, %s10
    %p149 = scmp.lt.s32.totalorder %s10, 3
    %p150 = pnand %p148, %p149
    %p151 = pneg %p150
    // Predicated region
    $region9: #{bert_forward.14} parent=5 // pred_check
      _
    $region10: #{bert_forward.14} parent=5 // pred_check_branch
      %153 = sbr.rel (%p150) target = $region12
    $region11: #{bert_forward.14} parent=5 // pred_region
      %s154 = ssub.s32 %s10, 1
    $region12: #{bert_forward.14} parent=5 // pred_fallthru
      _
    %p155 = scmp.lt.s32.totalorder %s10, 2
    // Predicated region
    $region13: #{bert_forward.14} parent=5 // pred_check
      %p156 = pneg %p155
    $region14: #{bert_forward.14} parent=5 // pred_check_branch
      %158 = sbr.rel (%p156) target = $region16
    $region15: #{bert_forward.14} parent=5 // pred_region
      // Predicated region
      $region17: #{bert_forward.14} parent=15 // pred_check
        %p159 = pneg %p30
      $region18: #{bert_forward.14} parent=15 // pred_check_branch
        %161 = sbr.rel (%p159) target = $region20
      $region19: #{bert_forward.14} parent=15 // pred_region
        %p162 = scmp.lt.s32.totalorder %s10, 1
        %s163 = scalar_select %p162, %s10, 1
        %s164 = smul.addr %s163, 4
        %s165 = scalar_lea.vmem %s0, %s164
      $region20: #{bert_forward.14} parent=15 // pred_fallthru
        _
      // Predicated region
      $region21: #{bert_forward.14} parent=15 // pred_check
        %p166 = pneg %p56
      $region22: #{bert_forward.14} parent=15 // pred_check_branch
        %168 = sbr.rel (%p166) target = $region24
      $region23: #{bert_forward.14} parent=15 // pred_region
        %p169 = scmp.lt.s32.totalorder %s10, 1
        %s170 = scalar_select %p169, %s10, 1
        %s171 = smul.addr %s170, 4
        %s172 = scalar_lea.vmem %s1, %s171
      $region24: #{bert_forward.14} parent=15 // pred_fallthru
        _
      // Predicated region
      $region25: #{bert_forward.14} parent=15 // pred_check
        %p173 = pneg %p82
      $region26: #{bert_forward.14} parent=15 // pred_check_branch
        %175 = sbr.rel (%p173) target = $region28
      $region27: #{bert_forward.14} parent=15 // pred_region
        %p176 = scmp.lt.s32.totalorder %s10, 1
        %s177 = scalar_select %p176, %s10, 1
        %s178 = smul.addr %s177, 4
        %s179 = scalar_lea.vmem %s2, %s178
      $region28: #{bert_forward.14} parent=15 // pred_fallthru
        _
      // Predicated region
      $region29: #{bert_forward.14} parent=15 // pred_check
        %p180 = pneg %p108
      $region30: #{bert_forward.14} parent=15 // pred_check_branch
        %182 = sbr.rel (%p180) target = $region32
      $region31: #{bert_forward.14} parent=15 // pred_region
        %p183 = scmp.lt.s32.totalorder %s10, 1
        %s184 = scalar_select %p183, %s10, 1
        %s185 = scalar_lea.vmem %s3, %s184
      $region32: #{bert_forward.14} parent=15 // pred_fallthru
        _
    $region16: #{bert_forward.14} parent=5 // pred_fallthru
      _
    %p186 = scmp.le.s32.totalorder 1, %s10
    %p187 = scmp.lt.s32.totalorder %s10, 3
    %p188 = pnand %p186, %p187
    %p189 = pneg %p188
    // Predicated region
    $region33: #{bert_forward.14} parent=5 // pred_check
      _
    $region34: #{bert_forward.14} parent=5 // pred_check_branch
      %191 = sbr.rel (%p188) target = $region36
    $region35: #{bert_forward.14} parent=5 // pred_region
      %s192 = ssub.s32 %s10, 1
      %p193 = scmp.lt.s32.totalorder %s15, 1
      %s194 = scalar_select %p193, %s15, 1
      %s195 = smul.addr %s194, 4
      %s196 = scalar_lea.vmem %s0, %s195
      %p197 = pneg %p36
      %p198 = pneg %p33
      %p199 = scmp.lt.s32.totalorder %s15, 1
      %s200 = scalar_select %p199, %s15, 1
      %s201 = smul.addr %s200, 4
      %s202 = scalar_lea.vmem %s1, %s201
      %p203 = pneg %p62
      %p204 = pneg %p59
      %p205 = scmp.lt.s32.totalorder %s15, 1
      %s206 = scalar_select %p205, %s15, 1
      %s207 = smul.addr %s206, 4
      %s208 = scalar_lea.vmem %s2, %s207
      %p209 = pneg %p88
      %p210 = pneg %p85
      %p211 = scmp.lt.s32.totalorder %s15, 1
      %s212 = scalar_select %p211, %s15, 1
      %s213 = scalar_lea.vmem %s3, %s212
      %p214 = pneg %p114
      %p215 = pneg %p111
      %p216 = pneg %p140
      %p217 = pneg %p137
      %p218 = scmp.lt.s32.totalorder %s15, 1
      %s219 = scalar_select %p218, %s15, 1
      %s220 = smul.addr %s219, 4
      %s221 = scalar_lea.vmem %s4, %s220
      %p222 = scmp.lt.s32.totalorder %s15, 1
      %s223 = scalar_select %p222, %s15, 1
      %s224 = smul.addr %s223, 4
      %s225 = scalar_lea.vmem %s0, %s224
      %p226 = scmp.lt.s32.totalorder %s15, 1
      %s227 = scalar_select %p226, %s15, 1
      %s228 = smul.addr %s227, 4
      %s229 = scalar_lea.vmem %s1, %s228
      %p230 = scmp.lt.s32.totalorder %s15, 1
      %s231 = scalar_select %p230, %s15, 1
      %s232 = smul.addr %s231, 4
      %s233 = scalar_lea.vmem %s2, %s232
      %p234 = scmp.lt.s32.totalorder %s15, 1
      %s235 = scalar_select %p234, %s15, 1
      %s236 = scalar_lea.vmem %s3, %s235
      %p237 = scmp.lt.s32.totalorder %s15, 1
      %s238 = scalar_select %p237, %s15, 1
      %s239 = smul.addr %s238, 4
      %s240 = scalar_lea.vmem %s4, %s239
      %v242 = vld [vmem:[%s225] sm:$0xf]
      %v243 = vld [vmem:[%s229] sm:$0xf]
      %v244 = vld [vmem:[%s233] sm:$0xf]
      %v245 = vld [vmem:[%s236] sm:$0x1]
      %v246 = vsub.f32 1.0, %v245
      %v247 = vmul.f32 %v246, -1e+09
      %vm248 = vcmask 64512
      %v250 = vsel %vm248, %v242, 0
      %v253 = vsel %vm248, %v243, 0
      %255 = vmatprep.subr.bf16.mxu0 0
      %256 = vmatpush1.bf16.xpose.msra.mxu0 %v253
      %257 = vmatprep.subr.bf16.mxu0 0
      %258 = vmatpush1.bf16.xpose.msra.mxu0 0
      %259 = vmatprep.subr.bf16.mxu0 0
      %260 = vmatpush1.bf16.xpose.msra.mxu0 0
      %261 = vmatprep.subr.bf16.mxu0 0
      %262 = vmatpush1.bf16.xpose.msra.mxu0 0
      %263 = vmatprep.subr.bf16.mxu0 0
      %264 = vmatpush1.bf16.xpose.msra.mxu0 0
      %265 = vmatprep.subr.bf16.mxu0 0
      %266 = vmatpush1.bf16.xpose.msra.mxu0 0
      %267 = vmatprep.subr.bf16.mxu0 0
      %268 = vmatpush1.bf16.xpose.msra.mxu0 0
      %269 = vmatprep.subr.bf16.mxu0 0
      %270 = vmatpush1.bf16.xpose.msra.mxu0 0
      %271 = vmatprep.subr.bf16.mxu0 0
      %272 = vmatpush1.bf16.xpose.msra.mxu0 0
      %273 = vmatprep.subr.bf16.mxu0 0
      %274 = vmatpush1.bf16.xpose.msra.mxu0 0
      %275 = vmatprep.subr.bf16.mxu0 0
      %276 = vmatpush1.bf16.xpose.msra.mxu0 0
      %277 = vmatprep.subr.bf16.mxu0 0
      %278 = vmatpush1.bf16.xpose.msra.mxu0 0
      %279 = vmatprep.subr.bf16.mxu0 0
      %280 = vmatpush1.bf16.xpose.msra.mxu0 0
      %281 = vmatprep.subr.bf16.mxu0 0
      %282 = vmatpush1.bf16.xpose.msra.mxu0 0
      %283 = vmatprep.subr.bf16.mxu0 0
      %284 = vmatpush1.bf16.xpose.msra.mxu0 0
      %285 = vmatprep.subr.bf16.mxu0 0
      %286 = vmatpush1.bf16.xpose.msra.mxu0 0
      %287 = vmatprep.mubr.bf16.mxu0 0
      %288 = vmatmul.mubr.bf16.gmra.mrb[0].mxu0 %v250
      %v289 = vpop.f32.mrb[0].mxu0
      %v290 = vadd.f32 0.0, %v289
      %v291 = vpop.f32.mrb[0].mxu0
      %v292 = vpop.f32.mrb[0].mxu0
      %v293 = vpop.f32.mrb[0].mxu0
      %294 = vdwg.mxu0
      %v295 = vmul.f32 %v290, 0.35355338
      %v297 = vlaneseq
      %v298 = vshrl.u32 %v297, 7
      %v299 = vsub.s32 0, %v298
      %v300 = vrot.slane %v247, %v299
      %v302 = vadd.f32 %v295, %v300
      %v303 = vsel %vm248, %v302, -inf
      %304 = vmax.xlane.f32.xlu0 %v303
      %v305 = vpop.xlane.xlu0 %304
      %v306 = vsub.f32 %v302, %v305
      %v307 = vmul.f32 %v306, 1.442695
      %v308 = vpow.pop %v307
      %v309 = vsel %vm248, %v308, 0.0
      %310 = vadd.xlane.f32.xlu0 %v309
      %v311 = vpop.xlane.xlu0 %310
      %v312 = vrcp.pop %v311
      %v313 = vmul.f32 %v308, %v312
      %v314 = vpack.c.bf16 %v313, %v313
      %v316 = vsel %vm248, %v314, 0
      %vm318 = vcmask 1043456
      %v320 = vsel %vm318, %v244, 0
      %322 = vmatprep.subr.bf16.mxu0 0
      %323 = vmatpush1.bf16.msra.mxu0 %v320
      %324 = vmatprep.subr.bf16.mxu0 0
      %325 = vmatpush1.bf16.msra.mxu0 0
      %326 = vmatprep.subr.bf16.mxu0 0
      %327 = vmatpush1.bf16.msra.mxu0 0
      %328 = vmatprep.subr.bf16.mxu0 0
      %329 = vmatpush1.bf16.msra.mxu0 0
      %330 = vmatprep.subr.bf16.mxu0 0
      %331 = vmatpush1.bf16.msra.mxu0 0
      %332 = vmatprep.subr.bf16.mxu0 0
      %333 = vmatpush1.bf16.msra.mxu0 0
      %334 = vmatprep.subr.bf16.mxu0 0
      %335 = vmatpush1.bf16.msra.mxu0 0
      %336 = vmatprep.subr.bf16.mxu0 0
      %337 = vmatpush1.bf16.msra.mxu0 0
      %338 = vmatprep.subr.bf16.mxu0 0
      %339 = vmatpush1.bf16.msra.mxu0 0
      %340 = vmatprep.subr.bf16.mxu0 0
      %341 = vmatpush1.bf16.msra.mxu0 0
      %342 = vmatprep.subr.bf16.mxu0 0
      %343 = vmatpush1.bf16.msra.mxu0 0
      %344 = vmatprep.subr.bf16.mxu0 0
      %345 = vmatpush1.bf16.msra.mxu0 0
      %346 = vmatprep.subr.bf16.mxu0 0
      %347 = vmatpush1.bf16.msra.mxu0 0
      %348 = vmatprep.subr.bf16.mxu0 0
      %349 = vmatpush1.bf16.msra.mxu0 0
      %350 = vmatprep.subr.bf16.mxu0 0
      %351 = vmatpush1.bf16.msra.mxu0 0
      %352 = vmatprep.subr.bf16.mxu0 0
      %353 = vmatpush1.bf16.msra.mxu0 0
      %354 = vmatprep.mubr.bf16.mxu0 0
      %355 = vmatmul.mubr.bf16.gmra.mrb[0].mxu0 %v316
      %v356 = vpop.f32.mrb[0].mxu0
      %v357 = vadd.f32 0.0, %v356
      %v358 = vpop.f32.mrb[0].mxu0
      %v359 = vpop.f32.mrb[0].mxu0
      %v360 = vpop.f32.mrb[0].mxu0
      %361 = vdwg.mxu0
      %v363 = vunpack.c.l.b16 %v242
      %v364 = vpack.c.b16 %v363, %v363
      %365 = vrot.lane.b32.xlu0 %v364, 120
      %v366 = vpop.permute.xlu0 %365
      %v368 = vunpack.c.l.b16 %v243
      %v369 = vpack.c.b16 %v368, %v368
      %370 = vrot.lane.b32.xlu0 %v369, 120
      %v371 = vpop.permute.xlu0 %370
      %v373 = vsel %vm248, %v366, 0
      %v376 = vsel %vm248, %v371, 0
      %378 = vmatprep.subr.bf16.mxu0 0
      %379 = vmatpush1.bf16.xpose.msra.mxu0 %v376
      %380 = vmatprep.subr.bf16.mxu0 0
      %381 = vmatpush1.bf16.xpose.msra.mxu0 0
      %382 = vmatprep.subr.bf16.mxu0 0
      %383 = vmatpush1.bf16.xpose.msra.mxu0 0
      %384 = vmatprep.subr.bf16.mxu0 0
      %385 = vmatpush1.bf16.xpose.msra.mxu0 0
      %386 = vmatprep.subr.bf16.mxu0 0
      %387 = vmatpush1.bf16.xpose.msra.mxu0 0
      %388 = vmatprep.subr.bf16.mxu0 0
      %389 = vmatpush1.bf16.xpose.msra.mxu0 0
      %390 = vmatprep.subr.bf16.mxu0 0
      %391 = vmatpush1.bf16.xpose.msra.mxu0 0
      %392 = vmatprep.subr.bf16.mxu0 0
      %393 = vmatpush1.bf16.xpose.msra.mxu0 0
      %394 = vmatprep.subr.bf16.mxu0 0
      %395 = vmatpush1.bf16.xpose.msra.mxu0 0
      %396 = vmatprep.subr.bf16.mxu0 0
      %397 = vmatpush1.bf16.xpose.msra.mxu0 0
      %398 = vmatprep.subr.bf16.mxu0 0
      %399 = vmatpush1.bf16.xpose.msra.mxu0 0
      %400 = vmatprep.subr.bf16.mxu0 0
      %401 = vmatpush1.bf16.xpose.msra.mxu0 0
      %402 = vmatprep.subr.bf16.mxu0 0
      %403 = vmatpush1.bf16.xpose.msra.mxu0 0
      %404 = vmatprep.subr.bf16.mxu0 0
      %405 = vmatpush1.bf16.xpose.msra.mxu0 0
      %406 = vmatprep.subr.bf16.mxu0 0
      %407 = vmatpush1.bf16.xpose.msra.mxu0 0
      %408 = vmatprep.subr.bf16.mxu0 0
      %409 = vmatpush1.bf16.xpose.msra.mxu0 0
      %410 = vmatprep.mubr.bf16.mxu0 0
      %411 = vmatmul.mubr.bf16.gmra.mrb[0].mxu0 %v373
      %v412 = vpop.f32.mrb[0].mxu0
      %v413 = vadd.f32 0.0, %v412
      %v414 = vpop.f32.mrb[0].mxu0
      %v415 = vpop.f32.mrb[0].mxu0
      %v416 = vpop.f32.mrb[0].mxu0
      %417 = vdwg.mxu0
      %v418 = vmul.f32 %v413, 0.35355338
      %v419 = vadd.f32 %v418, %v300
      %v420 = vsel %vm248, %v419, -inf
      %421 = vmax.xlane.f32.xlu0 %v420
      %v422 = vpop.xlane.xlu0 %421
      %v423 = vsub.f32 %v419, %v422
      %v424 = vmul.f32 %v423, 1.442695
      %v425 = vpow.pop %v424
      %v426 = vsel %vm248, %v425, 0.0
      %427 = vadd.xlane.f32.xlu0 %v426
      %v428 = vpop.xlane.xlu0 %427
      %v429 = vrcp.pop %v428
      %v430 = vmul.f32 %v425, %v429
      %v431 = vpack.c.bf16 %v430, %v430
      %v433 = vunpack.c.l.b16 %v244
      %v434 = vpack.c.b16 %v433, %v433
      %435 = vrot.lane.b32.xlu0 %v434, 120
      %v436 = vpop.permute.xlu0 %435
      %v438 = vsel %vm248, %v431, 0
      %v441 = vsel %vm318, %v436, 0
      %443 = vmatprep.subr.bf16.mxu0 0
      %444 = vmatpush1.bf16.msra.mxu0 %v441
      %445 = vmatprep.subr.bf16.mxu0 0
      %446 = vmatpush1.bf16.msra.mxu0 0
      %447 = vmatprep.subr.bf16.mxu0 0
      %448 = vmatpush1.bf16.msra.mxu0 0
      %449 = vmatprep.subr.bf16.mxu0 0
      %450 = vmatpush1.bf16.msra.mxu0 0
      %451 = vmatprep.subr.bf16.mxu0 0
      %452 = vmatpush1.bf16.msra.mxu0 0
      %453 = vmatprep.subr.bf16.mxu0 0
      %454 = vmatpush1.bf16.msra.mxu0 0
      %455 = vmatprep.subr.bf16.mxu0 0
      %456 = vmatpush1.bf16.msra.mxu0 0
      %457 = vmatprep.subr.bf16.mxu0 0
      %458 = vmatpush1.bf16.msra.mxu0 0
      %459 = vmatprep.subr.bf16.mxu0 0
      %460 = vmatpush1.bf16.msra.mxu0 0
      %461 = vmatprep.subr.bf16.mxu0 0
      %462 = vmatpush1.bf16.msra.mxu0 0
      %463 = vmatprep.subr.bf16.mxu0 0
      %464 = vmatpush1.bf16.msra.mxu0 0
      %465 = vmatprep.subr.bf16.mxu0 0
      %466 = vmatpush1.bf16.msra.mxu0 0
      %467 = vmatprep.subr.bf16.mxu0 0
      %468 = vmatpush1.bf16.msra.mxu0 0
      %469 = vmatprep.subr.bf16.mxu0 0
      %470 = vmatpush1.bf16.msra.mxu0 0
      %471 = vmatprep.subr.bf16.mxu0 0
      %472 = vmatpush1.bf16.msra.mxu0 0
      %473 = vmatprep.subr.bf16.mxu0 0
      %474 = vmatpush1.bf16.msra.mxu0 0
      %475 = vmatprep.mubr.bf16.mxu0 0
      %476 = vmatmul.mubr.bf16.gmra.mrb[0].mxu0 %v438
      %v477 = vpop.f32.mrb[0].mxu0
      %v478 = vadd.f32 0.0, %v477
      %v479 = vpop.f32.mrb[0].mxu0
      %v480 = vpop.f32.mrb[0].mxu0
      %v481 = vpop.f32.mrb[0].mxu0
      %482 = vdwg.mxu0
      %483 = vrot.lane.b32.xlu0 %v364, 112
      %v484 = vpop.permute.xlu0 %483
      %485 = vrot.lane.b32.xlu0 %v369, 112
      %v486 = vpop.permute.xlu0 %485
      %v488 = vsel %vm248, %v484, 0
      %v491 = vsel %vm248, %v486, 0
      %493 = vmatprep.subr.bf16.mxu0 0
      %494 = vmatpush1.bf16.xpose.msra.mxu0 %v491
      %495 = vmatprep.subr.bf16.mxu0 0
      %496 = vmatpush1.bf16.xpose.msra.mxu0 0
      %497 = vmatprep.subr.bf16.mxu0 0
      %498 = vmatpush1.bf16.xpose.msra.mxu0 0
      %499 = vmatprep.subr.bf16.mxu0 0
      %500 = vmatpush1.bf16.xpose.msra.mxu0 0
      %501 = vmatprep.subr.bf16.mxu0 0
      %502 = vmatpush1.bf16.xpose.msra.mxu0 0
      %503 = vmatprep.subr.bf16.mxu0 0
      %504 = vmatpush1.bf16.xpose.msra.mxu0 0
      %505 = vmatprep.subr.bf16.mxu0 0
      %506 = vmatpush1.bf16.xpose.msra.mxu0 0
      %507 = vmatprep.subr.bf16.mxu0 0
      %508 = vmatpush1.bf16.xpose.msra.mxu0 0
      %509 = vmatprep.subr.bf16.mxu0 0
      %510 = vmatpush1.bf16.xpose.msra.mxu0 0
      %511 = vmatprep.subr.bf16.mxu0 0
      %512 = vmatpush1.bf16.xpose.msra.mxu0 0
      %513 = vmatprep.subr.bf16.mxu0 0
      %514 = vmatpush1.bf16.xpose.msra.mxu0 0
      %515 = vmatprep.subr.bf16.mxu0 0
      %516 = vmatpush1.bf16.xpose.msra.mxu0 0
      %517 = vmatprep.subr.bf16.mxu0 0
      %518 = vmatpush1.bf16.xpose.msra.mxu0 0
      %519 = vmatprep.subr.bf16.mxu0 0
      %520 = vmatpush1.bf16.xpose.msra.mxu0 0
      %521 = vmatprep.subr.bf16.mxu0 0
      %522 = vmatpush1.bf16.xpose.msra.mxu0 0
      %523 = vmatprep.subr.bf16.mxu0 0
      %524 = vmatpush1.bf16.xpose.msra.mxu0 0
      %525 = vmatprep.mubr.bf16.mxu0 0
      %526 = vmatmul.mubr.bf16.gmra.mrb[0].mxu0 %v488
      %v527 = vpop.f32.mrb[0].mxu0
      %v528 = vadd.f32 0.0, %v527
      %v529 = vpop.f32.mrb[0].mxu0
      %v530 = vpop.f32.mrb[0].mxu0
      %v531 = vpop.f32.mrb[0].mxu0
      %532 = vdwg.mxu0
      %v533 = vmul.f32 %v528, 0.35355338
      %v534 = vadd.f32 %v533, %v300
      %v535 = vsel %vm248, %v534, -inf
      %536 = vmax.xlane.f32.xlu0 %v535
      %v537 = vpop.xlane.xlu0 %536
      %v538 = vsub.f32 %v534, %v537
      %v539 = vmul.f32 %v538, 1.442695
      %v540 = vpow.pop %v539
      %v541 = vsel %vm248, %v540, 0.0
      %542 = vadd.xlane.f32.xlu0 %v541
      %v543 = vpop.xlane.xlu0 %542
      %v544 = vrcp.pop %v543
      %v545 = vmul.f32 %v540, %v544
      %v546 = vpack.c.bf16 %v545, %v545
      %547 = vrot.lane.b32.xlu0 %v434, 112
      %v548 = vpop.permute.xlu0 %547
      %v550 = vsel %vm248, %v546, 0
      %v553 = vsel %vm318, %v548, 0
      %555 = vmatprep.subr.bf16.mxu0 0
      %556 = vmatpush1.bf16.msra.mxu0 %v553
      %557 = vmatprep.subr.bf16.mxu0 0
      %558 = vmatpush1.bf16.msra.mxu0 0
      %559 = vmatprep.subr.bf16.mxu0 0
      %560 = vmatpush1.bf16.msra.mxu0 0
      %561 = vmatprep.subr.bf16.mxu0 0
      %562 = vmatpush1.bf16.msra.mxu0 0
      %563 = vmatprep.subr.bf16.mxu0 0
      %564 = vmatpush1.bf16.msra.mxu0 0
      %565 = vmatprep.subr.bf16.mxu0 0
      %566 = vmatpush1.bf16.msra.mxu0 0
      %567 = vmatprep.subr.bf16.mxu0 0
      %568 = vmatpush1.bf16.msra.mxu0 0
      %569 = vmatprep.subr.bf16.mxu0 0
      %570 = vmatpush1.bf16.msra.mxu0 0
      %571 = vmatprep.subr.bf16.mxu0 0
      %572 = vmatpush1.bf16.msra.mxu0 0
      %573 = vmatprep.subr.bf16.mxu0 0
      %574 = vmatpush1.bf16.msra.mxu0 0
      %575 = vmatprep.subr.bf16.mxu0 0
      %576 = vmatpush1.bf16.msra.mxu0 0
      %577 = vmatprep.subr.bf16.mxu0 0
      %578 = vmatpush1.bf16.msra.mxu0 0
      %579 = vmatprep.subr.bf16.mxu0 0
      %580 = vmatpush1.bf16.msra.mxu0 0
      %581 = vmatprep.subr.bf16.mxu0 0
      %582 = vmatpush1.bf16.msra.mxu0 0
      %583 = vmatprep.subr.bf16.mxu0 0
      %584 = vmatpush1.bf16.msra.mxu0 0
      %585 = vmatprep.subr.bf16.mxu0 0
      %586 = vmatpush1.bf16.msra.mxu0 0
      %587 = vmatprep.mubr.bf16.mxu0 0
      %588 = vmatmul.mubr.bf16.gmra.mrb[0].mxu0 %v550
      %v589 = vpop.f32.mrb[0].mxu0
      %v590 = vadd.f32 0.0, %v589
      %v591 = vpop.f32.mrb[0].mxu0
      %v592 = vpop.f32.mrb[0].mxu0
      %v593 = vpop.f32.mrb[0].mxu0
      %594 = vdwg.mxu0
      %595 = vrot.lane.b32.xlu0 %v364, 104
      %v596 = vpop.permute.xlu0 %595
      %597 = vrot.lane.b32.xlu0 %v369, 104
      %v598 = vpop.permute.xlu0 %597
      %v600 = vsel %vm248, %v596, 0
      %v603 = vsel %vm248, %v598, 0
      %605 = vmatprep.subr.bf16.mxu0 0
      %606 = vmatpush1.bf16.xpose.msra.mxu0 %v603
      %607 = vmatprep.subr.bf16.mxu0 0
      %608 = vmatpush1.bf16.xpose.msra.mxu0 0
      %609 = vmatprep.subr.bf16.mxu0 0
      %610 = vmatpush1.bf16.xpose.msra.mxu0 0
      %611 = vmatprep.subr.bf16.mxu0 0
      %612 = vmatpush1.bf16.xpose.msra.mxu0 0
      %613 = vmatprep.subr.bf16.mxu0 0
      %614 = vmatpush1.bf16.xpose.msra.mxu0 0
      %615 = vmatprep.subr.bf16.mxu0 0
      %616 = vmatpush1.bf16.xpose.msra.mxu0 0
      %617 = vmatprep.subr.bf16.mxu0 0
      %618 = vmatpush1.bf16.xpose.msra.mxu0 0
      %619 = vmatprep.subr.bf16.mxu0 0
      %620 = vmatpush1.bf16.xpose.msra.mxu0 0
      %621 = vmatprep.subr.bf16.mxu0 0
      %622 = vmatpush1.bf16.xpose.msra.mxu0 0
      %623 = vmatprep.subr.bf16.mxu0 0
      %624 = vmatpush1.bf16.xpose.msra.mxu0 0
      %625 = vmatprep.subr.bf16.mxu0 0
      %626 = vmatpush1.bf16.xpose.msra.mxu0 0
      %627 = vmatprep.subr.bf16.mxu0 0
      %628 = vmatpush1.bf16.xpose.msra.mxu0 0
      %629 = vmatprep.subr.bf16.mxu0 0
      %630 = vmatpush1.bf16.xpose.msra.mxu0 0
      %631 = vmatprep.subr.bf16.mxu0 0
      %632 = vmatpush1.bf16.xpose.msra.mxu0 0
      %633 = vmatprep.subr.bf16.mxu0 0
      %634 = vmatpush1.bf16.xpose.msra.mxu0 0
      %635 = vmatprep.subr.bf16.mxu0 0
      %636 = vmatpush1.bf16.xpose.msra.mxu0 0
      %637 = vmatprep.mubr.bf16.mxu0 0
      %638 = vmatmul.mubr.bf16.gmra.mrb[0].mxu0 %v600
      %v639 = vpop.f32.mrb[0].mxu0
      %v640 = vadd.f32 0.0, %v639
      %v641 = vpop.f32.mrb[0].mxu0
      %v642 = vpop.f32.mrb[0].mxu0
      %v643 = vpop.f32.mrb[0].mxu0
      %644 = vdwg.mxu0
      %v645 = vmul.f32 %v640, 0.35355338
      %v646 = vadd.f32 %v645, %v300
      %v647 = vsel %vm248, %v646, -inf
      %648 = vmax.xlane.f32.xlu0 %v647
      %v649 = vpop.xlane.xlu0 %648
      %v650 = vsub.f32 %v646, %v649
      %v651 = vmul.f32 %v650, 1.442695
      %v652 = vpow.pop %v651
      %v653 = vsel %vm248, %v652, 0.0
      %654 = vadd.xlane.f32.xlu0 %v653
      %v655 = vpop.xlane.xlu0 %654
      %v656 = vrcp.pop %v655
      %v657 = vmul.f32 %v652, %v656
      %v658 = vpack.c.bf16 %v657, %v657
      %659 = vrot.lane.b32.xlu0 %v434, 104
      %v660 = vpop.permute.xlu0 %659
      %v662 = vsel %vm248, %v658, 0
      %v665 = vsel %vm318, %v660, 0
      %667 = vmatprep.subr.bf16.mxu0 0
      %668 = vmatpush1.bf16.msra.mxu0 %v665
      %669 = vmatprep.subr.bf16.mxu0 0
      %670 = vmatpush1.bf16.msra.mxu0 0
      %671 = vmatprep.subr.bf16.mxu0 0
      %672 = vmatpush1.bf16.msra.mxu0 0
      %673 = vmatprep.subr.bf16.mxu0 0
      %674 = vmatpush1.bf16.msra.mxu0 0
      %675 = vmatprep.subr.bf16.mxu0 0
      %676 = vmatpush1.bf16.msra.mxu0 0
      %677 = vmatprep.subr.bf16.mxu0 0
      %678 = vmatpush1.bf16.msra.mxu0 0
      %679 = vmatprep.subr.bf16.mxu0 0
      %680 = vmatpush1.bf16.msra.mxu0 0
      %681 = vmatprep.subr.bf16.mxu0 0
      %682 = vmatpush1.bf16.msra.mxu0 0
      %683 = vmatprep.subr.bf16.mxu0 0
      %684 = vmatpush1.bf16.msra.mxu0 0
      %685 = vmatprep.subr.bf16.mxu0 0
      %686 = vmatpush1.bf16.msra.mxu0 0
      %687 = vmatprep.subr.bf16.mxu0 0
      %688 = vmatpush1.bf16.msra.mxu0 0
      %689 = vmatprep.subr.bf16.mxu0 0
      %690 = vmatpush1.bf16.msra.mxu0 0
      %691 = vmatprep.subr.bf16.mxu0 0
      %692 = vmatpush1.bf16.msra.mxu0 0
      %693 = vmatprep.subr.bf16.mxu0 0
      %694 = vmatpush1.bf16.msra.mxu0 0
      %695 = vmatprep.subr.bf16.mxu0 0
      %696 = vmatpush1.bf16.msra.mxu0 0
      %697 = vmatprep.subr.bf16.mxu0 0
      %698 = vmatpush1.bf16.msra.mxu0 0
      %699 = vmatprep.mubr.bf16.mxu0 0
      %700 = vmatmul.mubr.bf16.gmra.mrb[0].mxu0 %v662
      %v701 = vpop.f32.mrb[0].mxu0
      %v702 = vadd.f32 0.0, %v701
      %v703 = vpop.f32.mrb[0].mxu0
      %v704 = vpop.f32.mrb[0].mxu0
      %v705 = vpop.f32.mrb[0].mxu0
      %706 = vdwg.mxu0
      %708 = vrot.lane.b32.xlu0 %v478, 8
      %v709 = vpop.permute.xlu0 %708
      %712 = vrot.lane.b32.xlu0 %v590, 16
      %v713 = vpop.permute.xlu0 %712
      %716 = vrot.lane.b32.xlu0 %v702, 24
      %v717 = vpop.permute.xlu0 %716
      %v719 = vsel %vm248, %v357, %v709
      %vm720 = vcmask 130048
      %v721 = vsel %vm720, %v719, %v713
      %vm722 = vcmask 195584
      %v723 = vsel %vm722, %v721, %v717
      %v724 = vpack.c.bf16 %v723, %v723
      %vm725 = vcmask 257024
      %726 = vst.msk [vmem:[%s240] sm:$0xf] %vm725, %v724
      %p727 = scmp.lt.s32.totalorder %s15, 1
      %s728 = scalar_select %p727, %s15, 1
      %s729 = smul.addr %s728, 4
      %s730 = scalar_lea.vmem %s4, %s729
      // Predicated region
      $region37: #{bert_forward.14} parent=35 // pred_check
        %p731 = pneg %p137
      $region38: #{bert_forward.14} parent=35 // pred_check_branch
        %733 = sbr.rel (%p731) target = $region40
      $region39: #{bert_forward.14} parent=35 // pred_region
        _
      $region40: #{bert_forward.14} parent=35 // pred_fallthru
        _
    $region36: #{bert_forward.14} parent=5 // pred_fallthru
      _
    %p734 = scmp.le.s32.totalorder 2, %s10
    // Predicated region
    $region41: #{bert_forward.14} parent=5 // pred_check
      %p735 = pneg %p734
    $region42: #{bert_forward.14} parent=5 // pred_check_branch
      %737 = sbr.rel (%p735) target = $region44
    $region43: #{bert_forward.14} parent=5 // pred_region
      %s738 = ssub.s32 %s10, 2
      // Predicated region
      $region45: #{bert_forward.14} parent=43 // pred_check
        %p739 = pneg %p143
      $region46: #{bert_forward.14} parent=43 // pred_check_branch
        %741 = sbr.rel (%p739) target = $region48
      $region47: #{bert_forward.14} parent=43 // pred_region
        %p742 = scmp.lt.s32.totalorder %s16, 1
        %s743 = scalar_select %p742, %s16, 1
        %s744 = smul.addr %s743, 4
        %s745 = scalar_lea.vmem %s4, %s744
      $region48: #{bert_forward.14} parent=43 // pred_fallthru
        _
    $region44: #{bert_forward.14} parent=5 // pred_fallthru
      _
  $region6: #{bert_forward.14} parent=0 // loop_footer
    %s14 = sadd.s32 1, %s10
  $region7: #{bert_forward.14} parent=0 // loop_footer_branch
    %9 = sbr.rel target = $region3
  $region8: #{bert_forward.14} parent=0 // loop_exit
    _

// kernel: bert_forward.17
$region0: #{bert_forward.17}
  #allocation0 [shape = 'u32[]', space=smem, size = 0x4, offset = 0x4, fixed_abs, tag = 'smem constant byte address 0x4 - core index']
  #allocation1 [shape = 'u32[144,128]{1,0:T(1,128)}', space=vmem, size = 0x12000, scoped, tag = 'internal scratch']
  #allocation2 [shape = 'f32[16,32]{1,0:T(8,128)}', space=vmem, size = 0x2000, scoped, tag = 'scratch operand']
  %s0 = inlined_call_operand.vmem [shape: bf16[16,64], index: 0, kind: input, shape index: {}]
  %s1 = inlined_call_operand.vmem [shape: bf16[64,32], index: 1, kind: input, shape index: {}]
  %s2 = inlined_call_operand.vmem [shape: f32[1,32], index: 2, kind: input, shape index: {}]
  %s3 = inlined_call_operand.vmem [shape: bf16[16,32], index: 3, kind: input, shape index: {}]
  %s4 = inlined_call_operand.vmem [shape: f32[1,32], index: 4, kind: input, shape index: {}]
  %s5 = inlined_call_operand.vmem [shape: f32[1,32], index: 5, kind: input, shape index: {}]
  %s6 = inlined_call_operand.vmem [shape: bf16[16,32], index: 6, kind: output, shape index: {}]
  %s7 = sld [smem:[#allocation0]]
  $region42: #{bert_forward.17} parent=0
    _
  %s9 = ssub.s32 1, %s7
  %s10 = scalar_select 0, %s9, %s7
  // Predicated region
  $region2: #{bert_forward.17} parent=0 // pred_check
    _
  $region3: #{bert_forward.17} parent=0 // pred_check_branch
    %12 = sbr.rel (0) target = $region5
  $region4: #{bert_forward.17} parent=0 // pred_region
    _
  $region5: #{bert_forward.17} parent=0 // pred_fallthru
    _
  // Predicated region
  $region6: #{bert_forward.17} parent=0 // pred_check
    _
  $region7: #{bert_forward.17} parent=0 // pred_check_branch
    %14 = sbr.rel (0) target = $region9
  $region8: #{bert_forward.17} parent=0 // pred_region
    _
  $region9: #{bert_forward.17} parent=0 // pred_fallthru
    _
  // Predicated region
  $region10: #{bert_forward.17} parent=0 // pred_check
    _
  $region11: #{bert_forward.17} parent=0 // pred_check_branch
    %16 = sbr.rel (0) target = $region13
  $region12: #{bert_forward.17} parent=0 // pred_region
    _
  $region13: #{bert_forward.17} parent=0 // pred_fallthru
    _
  // Predicated region
  $region14: #{bert_forward.17} parent=0 // pred_check
    _
  $region15: #{bert_forward.17} parent=0 // pred_check_branch
    %18 = sbr.rel (0) target = $region17
  $region16: #{bert_forward.17} parent=0 // pred_region
    _
  $region17: #{bert_forward.17} parent=0 // pred_fallthru
    _
  // Predicated region
  $region18: #{bert_forward.17} parent=0 // pred_check
    _
  $region19: #{bert_forward.17} parent=0 // pred_check_branch
    %20 = sbr.rel (0) target = $region21
  $region20: #{bert_forward.17} parent=0 // pred_region
    _
  $region21: #{bert_forward.17} parent=0 // pred_fallthru
    _
  // Predicated region
  $region22: #{bert_forward.17} parent=0 // pred_check
    _
  $region23: #{bert_forward.17} parent=0 // pred_check_branch
    %22 = sbr.rel (0) target = $region25
  $region24: #{bert_forward.17} parent=0 // pred_region
    _
  $region25: #{bert_forward.17} parent=0 // pred_fallthru
    _
  %p24 = scmp.eq.s32.totalorder 0, 0
  // Predicated region
  $region26: #{bert_forward.17} parent=0 // pred_check
    %p25 = pneg %p24
  $region27: #{bert_forward.17} parent=0 // pred_check_branch
    %27 = sbr.rel (%p25) target = $region29
  $region28: #{bert_forward.17} parent=0 // pred_region
    %vm28 = vcmask 261120
    %29 = vst.msk [vmem:[#allocation2] sm:$0xff] %vm28, 0.0
    %30 = vst.msk [vmem:[#allocation2 + $0x8] sm:$0xff] %vm28, 0.0
  $region29: #{bert_forward.17} parent=0 // pred_fallthru
    _
  %v31 = vld [vmem:[#allocation2] sm:$0xff]
  %v32 = vld [vmem:[#allocation2 + $0x8] sm:$0xff]
  %v33 = vld [vmem:[%s0] sm:$0xf]
  %v34 = vld [vmem:[%s0 + $0x4] sm:$0xf]
  %v35 = vld [vmem:[%s1] sm:$0xf]
  %v36 = vld [vmem:[%s1 + $0x4] sm:$0xf]
  %v37 = vld [vmem:[%s1 + $0x8] sm:$0xf]
  %v38 = vld [vmem:[%s1 + $0xc] sm:$0xf]
  %v39 = vld [vmem:[%s1 + $0x10] sm:$0xf]
  %v40 = vld [vmem:[%s1 + $0x14] sm:$0xf]
  %v41 = vld [vmem:[%s1 + $0x18] sm:$0xf]
  %v42 = vld [vmem:[%s1 + $0x1c] sm:$0xf]
  %v45 = vunpack.c.l.b16 %v33
  %v46 = vunpack.c.l.b16 %v34
  %v47 = vpack.c.b16 %v46, %v45
  %v56 = vunpack.c.l.b16 %v35
  %v57 = vunpack.c.l.b16 %v36
  %v58 = vunpack.c.l.b16 %v37
  %v59 = vunpack.c.l.b16 %v38
  %v60 = vunpack.c.l.b16 %v39
  %v61 = vunpack.c.l.b16 %v40
  %v62 = vunpack.c.l.b16 %v41
  %v63 = vunpack.c.l.b16 %v42
  %v64 = vpack.c.b16 %v57, %v56
  %v65 = vpack.c.b16 %v59, %v58
  %v66 = vpack.c.b16 %v61, %v60
  %v67 = vpack.c.b16 %v63, %v62
  %vm72 = vcmask 523264
  %v74 = vsel %vm72, %v47, 0
  %76 = vmatprep.subr.bf16.mxu0 0
  %77 = vmatpush1.bf16.msra.mxu0 %v64
  %78 = vmatprep.subr.bf16.mxu0 0
  %79 = vmatpush1.bf16.msra.mxu0 %v65
  %80 = vmatprep.subr.bf16.mxu0 0
  %81 = vmatpush1.bf16.msra.mxu0 %v66
  %82 = vmatprep.subr.bf16.mxu0 0
  %83 = vmatpush1.bf16.msra.mxu0 %v67
  %84 = vmatprep.subr.bf16.mxu0 0
  %85 = vmatpush1.bf16.msra.mxu0 0
  %86 = vmatprep.subr.bf16.mxu0 0
  %87 = vmatpush1.bf16.msra.mxu0 0
  %88 = vmatprep.subr.bf16.mxu0 0
  %89 = vmatpush1.bf16.msra.mxu0 0
  %90 = vmatprep.subr.bf16.mxu0 0
  %91 = vmatpush1.bf16.msra.mxu0 0
  %92 = vmatprep.subr.bf16.mxu0 0
  %93 = vmatpush1.bf16.msra.mxu0 0
  %94 = vmatprep.subr.bf16.mxu0 0
  %95 = vmatpush1.bf16.msra.mxu0 0
  %96 = vmatprep.subr.bf16.mxu0 0
  %97 = vmatpush1.bf16.msra.mxu0 0
  %98 = vmatprep.subr.bf16.mxu0 0
  %99 = vmatpush1.bf16.msra.mxu0 0
  %100 = vmatprep.subr.bf16.mxu0 0
  %101 = vmatpush1.bf16.msra.mxu0 0
  %102 = vmatprep.subr.bf16.mxu0 0
  %103 = vmatpush1.bf16.msra.mxu0 0
  %104 = vmatprep.subr.bf16.mxu0 0
  %105 = vmatpush1.bf16.msra.mxu0 0
  %106 = vmatprep.subr.bf16.mxu0 0
  %107 = vmatpush1.bf16.msra.mxu0 0
  %108 = vmatprep.mubr.bf16.mxu0 0
  %109 = vmatmul.mubr.bf16.gmra.mrb[0].mxu0 %v74
  %v110 = vpop.f32.mrb[0].mxu0
  %v111 = vadd.f32 0.0, %v110
  %v112 = vpop.f32.mrb[0].mxu0
  %v113 = vpop.f32.mrb[0].mxu0
  %v114 = vadd.f32 0.0, %v113
  %v115 = vpop.f32.mrb[0].mxu0
  %116 = vdwg.mxu0
  %v117 = vadd.f32 %v31, %v111
  %v118 = vadd.f32 %v32, %v114
  %vm119 = vcmask 261120
  %120 = vst.msk [vmem:[#allocation2] sm:$0xff] %vm119, %v117
  %121 = vst.msk [vmem:[#allocation2 + $0x8] sm:$0xff] %vm119, %v118
  // Predicated region
  $region30: #{bert_forward.17} parent=0 // pred_check
    %p122 = pneg %p24
  $region31: #{bert_forward.17} parent=0 // pred_check_branch
    %124 = sbr.rel (%p122) target = $region33
  $region32: #{bert_forward.17} parent=0 // pred_region
    %v125 = vld [vmem:[#allocation2] sm:$0xff]
    %v126 = vld [vmem:[#allocation2 + $0x8] sm:$0xff]
    %v127 = vld [vmem:[%s2] sm:$0x1]
    %v129 = vlaneseq
    %v130 = vshrl.u32 %v129, 7
    %v131 = vsub.s32 0, %v130
    %v132 = vrot.slane %v127, %v131
    %v134 = vadd.f32 %v125, %v132
    %v135 = vadd.f32 %v126, %v132
    %v136 = vld [vmem:[%s3] sm:$0xf]
    %v137 = vld [vmem:[%s3 + $0x4] sm:$0xf]
    %v138 = vunpack.c.l.bf16 %v136
    %v139 = vunpack.c.l.bf16 %v137
    %v140 = vadd.f32 %v134, %v138
    %v141 = vadd.f32 %v135, %v139
    %v142 = vsel %vm119, %v140, 0.0
    %143 = vadd.xlane.f32.xlu0 %v142
    %v144 = vpop.xlane.xlu0 %143
    %v145 = vsel %vm119, %v141, 0.0
    %146 = vadd.xlane.f32.xlu0 %v145
    %v147 = vpop.xlane.xlu0 %146
    %v148 = vrcp.pop 32.0
    %v149 = vmul.f32 %v144, %v148
    %v150 = vmul.f32 %v147, %v148
    %v151 = vsub.f32 %v140, %v149
    %v152 = vsub.f32 %v141, %v150
    %v153 = vmul.f32 %v151, %v151
    %v154 = vmul.f32 %v152, %v152
    %v155 = vsel %vm119, %v153, 0.0
    %156 = vadd.xlane.f32.xlu0 %v155
    %v157 = vpop.xlane.xlu0 %156
    %v158 = vsel %vm119, %v154, 0.0
    %159 = vadd.xlane.f32.xlu0 %v158
    %v160 = vpop.xlane.xlu0 %159
    %v161 = vmul.f32 %v157, %v148
    %v162 = vmul.f32 %v160, %v148
    %v163 = vadd.f32 %v161, 1e-12
    %v164 = vadd.f32 %v162, 1e-12
    %v165 = vrsqrt.pop %v163
    %v166 = vrsqrt.pop %v164
    %v167 = vmul.f32 %v151, %v165
    %v168 = vmul.f32 %v152, %v166
    %v169 = vld [vmem:[%s4] sm:$0x1]
    %v171 = vlaneseq
    %v172 = vshrl.u32 %v171, 7
    %v173 = vsub.s32 0, %v172
    %v174 = vrot.slane %v169, %v173
    %v176 = vmul.f32 %v167, %v174
    %v177 = vmul.f32 %v168, %v174
    %v178 = vld [vmem:[%s5] sm:$0x1]
    %v180 = vlaneseq
    %v181 = vshrl.u32 %v180, 7
    %v182 = vsub.s32 0, %v181
    %v183 = vrot.slane %v178, %v182
    %v185 = vadd.f32 %v176, %v183
    %v186 = vadd.f32 %v177, %v183
    %v187 = vpack.c.bf16 %v186, %v185
    %v189 = vunpack.c.l.b16 %v187
    %v190 = vunpack.c.h.b16 %v187
    %v191 = vpack.c.b16 %v189, %v189
    %v192 = vpack.c.b16 %v190, %v190
    %vm195 = vcmask 257024
    %196 = vst.msk [vmem:[%s6] sm:$0xf] %vm195, %v191
    %197 = vst.msk [vmem:[%s6 + $0x4] sm:$0xf] %vm195, %v192
  $region33: #{bert_forward.17} parent=0 // pred_fallthru
    _
  // Predicated region
  $region34: #{bert_forward.17} parent=0 // pred_check
    _
  $region35: #{bert_forward.17} parent=0 // pred_check_branch
    %199 = sbr.rel (0) target = $region37
  $region36: #{bert_forward.17} parent=0 // pred_region
    _
  $region37: #{bert_forward.17} parent=0 // pred_fallthru
    _
  // Predicated region
  $region38: #{bert_forward.17} parent=0 // pred_check
    _
  $region39: #{bert_forward.17} parent=0 // pred_check_branch
    %201 = sbr.rel (0) target = $region41
  $region40: #{bert_forward.17} parent=0 // pred_region
    _
  $region41: #{bert_forward.17} parent=0 // pred_fallthru
    _

// kernel: bert_forward.23
$region0: #{bert_forward.23}
  #allocation0 [shape = 'u32[]', space=smem, size = 0x4, offset = 0x4, fixed_abs, tag = 'smem constant byte address 0x4 - core index']
  #allocation1 [shape = 'u32[144,128]{1,0:T(1,128)}', space=vmem, size = 0x12000, scoped, tag = 'internal scratch']
  #allocation2 [shape = 'f32[16,128]{1,0:T(8,128)}', space=vmem, size = 0x2000, scoped, tag = 'scratch operand']
  %s0 = inlined_call_operand.vmem [shape: bf16[16,32], index: 0, kind: input, shape index: {}]
  %s1 = inlined_call_operand.vmem [shape: bf16[32,128], index: 1, kind: input, shape index: {}]
  %s2 = inlined_call_operand.vmem [shape: f32[1,128], index: 2, kind: input, shape index: {}]
  %s3 = inlined_call_operand.vmem [shape: f32[16,128], index: 3, kind: output, shape index: {}]
  %s4 = sld [smem:[#allocation0]]
  $region30: #{bert_forward.23} parent=0
    _
  %s6 = ssub.s32 1, %s4
  %s7 = scalar_select 0, %s6, %s4
  // Predicated region
  $region2: #{bert_forward.23} parent=0 // pred_check
    _
  $region3: #{bert_forward.23} parent=0 // pred_check_branch
    %9 = sbr.rel (0) target = $region5
  $region4: #{bert_forward.23} parent=0 // pred_region
    _
  $region5: #{bert_forward.23} parent=0 // pred_fallthru
    _
  // Predicated region
  $region6: #{bert_forward.23} parent=0 // pred_check
    _
  $region7: #{bert_forward.23} parent=0 // pred_check_branch
    %11 = sbr.rel (0) target = $region9
  $region8: #{bert_forward.23} parent=0 // pred_region
    _
  $region9: #{bert_forward.23} parent=0 // pred_fallthru
    _
  // Predicated region
  $region10: #{bert_forward.23} parent=0 // pred_check
    _
  $region11: #{bert_forward.23} parent=0 // pred_check_branch
    %13 = sbr.rel (0) target = $region13
  $region12: #{bert_forward.23} parent=0 // pred_region
    _
  $region13: #{bert_forward.23} parent=0 // pred_fallthru
    _
  %p15 = scmp.eq.s32.totalorder 0, 0
  // Predicated region
  $region14: #{bert_forward.23} parent=0 // pred_check
    %p16 = pneg %p15
  $region15: #{bert_forward.23} parent=0 // pred_check_branch
    %18 = sbr.rel (%p16) target = $region17
  $region16: #{bert_forward.23} parent=0 // pred_region
    %19 = vst [vmem:[#allocation2] sm:$0xff] 0.0
    %20 = vst [vmem:[#allocation2 + $0x8] sm:$0xff] 0.0
  $region17: #{bert_forward.23} parent=0 // pred_fallthru
    _
  %v21 = vld [vmem:[#allocation2] sm:$0xff]
  %v22 = vld [vmem:[#allocation2 + $0x8] sm:$0xff]
  %v23 = vld [vmem:[%s0] sm:$0xf]
  %v24 = vld [vmem:[%s0 + $0x4] sm:$0xf]
  %v25 = vld [vmem:[%s1] sm:$0xf]
  %v26 = vld [vmem:[%s1 + $0x4] sm:$0xf]
  %v27 = vld [vmem:[%s1 + $0x8] sm:$0xf]
  %v28 = vld [vmem:[%s1 + $0xc] sm:$0xf]
  %v31 = vunpack.c.l.b16 %v23
  %v32 = vunpack.c.l.b16 %v24
  %v33 = vpack.c.b16 %v32, %v31
  %v38 = vunpack.c.l.b16 %v25
  %v39 = vunpack.c.l.b16 %v26
  %v40 = vunpack.c.l.b16 %v27
  %v41 = vunpack.c.l.b16 %v28
  %v42 = vpack.c.b16 %v39, %v38
  %v43 = vpack.c.b16 %v41, %v40
  %vm46 = vcmask 261120
  %v48 = vsel %vm46, %v33, 0
  %50 = vmatprep.subr.bf16.mxu0 0
  %51 = vmatpush1.bf16.msra.mxu0 %v42
  %52 = vmatprep.subr.bf16.mxu0 0
  %53 = vmatpush1.bf16.msra.mxu0 %v43
  %54 = vmatprep.subr.bf16.mxu0 0
  %55 = vmatpush1.bf16.msra.mxu0 0
  %56 = vmatprep.subr.bf16.mxu0 0
  %57 = vmatpush1.bf16.msra.mxu0 0
  %58 = vmatprep.subr.bf16.mxu0 0
  %59 = vmatpush1.bf16.msra.mxu0 0
  %60 = vmatprep.subr.bf16.mxu0 0
  %61 = vmatpush1.bf16.msra.mxu0 0
  %62 = vmatprep.subr.bf16.mxu0 0
  %63 = vmatpush1.bf16.msra.mxu0 0
  %64 = vmatprep.subr.bf16.mxu0 0
  %65 = vmatpush1.bf16.msra.mxu0 0
  %66 = vmatprep.subr.bf16.mxu0 0
  %67 = vmatpush1.bf16.msra.mxu0 0
  %68 = vmatprep.subr.bf16.mxu0 0
  %69 = vmatpush1.bf16.msra.mxu0 0
  %70 = vmatprep.subr.bf16.mxu0 0
  %71 = vmatpush1.bf16.msra.mxu0 0
  %72 = vmatprep.subr.bf16.mxu0 0
  %73 = vmatpush1.bf16.msra.mxu0 0
  %74 = vmatprep.subr.bf16.mxu0 0
  %75 = vmatpush1.bf16.msra.mxu0 0
  %76 = vmatprep.subr.bf16.mxu0 0
  %77 = vmatpush1.bf16.msra.mxu0 0
  %78 = vmatprep.subr.bf16.mxu0 0
  %79 = vmatpush1.bf16.msra.mxu0 0
  %80 = vmatprep.subr.bf16.mxu0 0
  %81 = vmatpush1.bf16.msra.mxu0 0
  %82 = vmatprep.mubr.bf16.mxu0 0
  %83 = vmatmul.mubr.bf16.gmra.mrb[0].mxu0 %v48
  %v84 = vpop.f32.mrb[0].mxu0
  %v85 = vadd.f32 0.0, %v84
  %v86 = vpop.f32.mrb[0].mxu0
  %v87 = vpop.f32.mrb[0].mxu0
  %v88 = vadd.f32 0.0, %v87
  %v89 = vpop.f32.mrb[0].mxu0
  %90 = vdwg.mxu0
  %v91 = vadd.f32 %v21, %v85
  %v92 = vadd.f32 %v22, %v88
  %93 = vst [vmem:[#allocation2] sm:$0xff] %v91
  %94 = vst [vmem:[#allocation2 + $0x8] sm:$0xff] %v92
  // Predicated region
  $region18: #{bert_forward.23} parent=0 // pred_check
    %p95 = pneg %p15
  $region19: #{bert_forward.23} parent=0 // pred_check_branch
    %97 = sbr.rel (%p95) target = $region21
  $region20: #{bert_forward.23} parent=0 // pred_region
    %v98 = vld [vmem:[#allocation2] sm:$0xff]
    %v99 = vld [vmem:[#allocation2 + $0x8] sm:$0xff]
    %v100 = vld [vmem:[%s2] sm:$0x1]
    %v102 = vlaneseq
    %v103 = vshrl.u32 %v102, 7
    %v104 = vsub.s32 0, %v103
    %v105 = vrot.slane %v100, %v104
    %v107 = vadd.f32 %v98, %v105
    %v108 = vadd.f32 %v99, %v105
    %109 = vst [vmem:[%s3] sm:$0xff] %v107
    %110 = vst [vmem:[%s3 + $0x8] sm:$0xff] %v108
  $region21: #{bert_forward.23} parent=0 // pred_fallthru
    _
  // Predicated region
  $region22: #{bert_forward.23} parent=0 // pred_check
    _
  $region23: #{bert_forward.23} parent=0 // pred_check_branch
    %112 = sbr.rel (0) target = $region25
  $region24: #{bert_forward.23} parent=0 // pred_region
    _
  $region25: #{bert_forward.23} parent=0 // pred_fallthru
    _
  // Predicated region
  $region26: #{bert_forward.23} parent=0 // pred_check
    _
  $region27: #{bert_forward.23} parent=0 // pred_check_branch
    %114 = sbr.rel (0) target = $region29
  $region28: #{bert_forward.23} parent=0 // pred_region
    _
  $region29: #{bert_forward.23} parent=0 // pred_fallthru
    _

// kernel: bert_forward.16
$region0: #{bert_forward.16}
  #allocation0 [shape = 'u32[]', space=smem, size = 0x4, offset = 0x4, fixed_abs, tag = 'smem constant byte address 0x4 - core index']
  #allocation1 [shape = 'u32[144,128]{1,0:T(1,128)}', space=vmem, size = 0x12000, scoped, tag = 'internal scratch']
  #allocation2 [shape = 'f32[16,64]{1,0:T(8,128)}', space=vmem, size = 0x2000, scoped, tag = 'scratch operand']
  %s0 = inlined_call_operand.vmem [shape: bf16[16,32], index: 0, kind: input, shape index: {}]
  %s1 = inlined_call_operand.vmem [shape: bf16[32,64], index: 1, kind: input, shape index: {}]
  %s2 = inlined_call_operand.vmem [shape: f32[1,64], index: 2, kind: input, shape index: {}]
  %s3 = inlined_call_operand.vmem [shape: bf16[16,64], index: 3, kind: output, shape index: {}]
  %s4 = sld [smem:[#allocation0]]
  $region30: #{bert_forward.16} parent=0
    _
  %s6 = ssub.s32 1, %s4
  %s7 = scalar_select 0, %s6, %s4
  // Predicated region
  $region2: #{bert_forward.16} parent=0 // pred_check
    _
  $region3: #{bert_forward.16} parent=0 // pred_check_branch
    %9 = sbr.rel (0) target = $region5
  $region4: #{bert_forward.16} parent=0 // pred_region
    _
  $region5: #{bert_forward.16} parent=0 // pred_fallthru
    _
  // Predicated region
  $region6: #{bert_forward.16} parent=0 // pred_check
    _
  $region7: #{bert_forward.16} parent=0 // pred_check_branch
    %11 = sbr.rel (0) target = $region9
  $region8: #{bert_forward.16} parent=0 // pred_region
    _
  $region9: #{bert_forward.16} parent=0 // pred_fallthru
    _
  // Predicated region
  $region10: #{bert_forward.16} parent=0 // pred_check
    _
  $region11: #{bert_forward.16} parent=0 // pred_check_branch
    %13 = sbr.rel (0) target = $region13
  $region12: #{bert_forward.16} parent=0 // pred_region
    _
  $region13: #{bert_forward.16} parent=0 // pred_fallthru
    _
  %p15 = scmp.eq.s32.totalorder 0, 0
  // Predicated region
  $region14: #{bert_forward.16} parent=0 // pred_check
    %p16 = pneg %p15
  $region15: #{bert_forward.16} parent=0 // pred_check_branch
    %18 = sbr.rel (%p16) target = $region17
  $region16: #{bert_forward.16} parent=0 // pred_region
    %vm19 = vcmask 523264
    %20 = vst.msk [vmem:[#allocation2] sm:$0xff] %vm19, 0.0
    %21 = vst.msk [vmem:[#allocation2 + $0x8] sm:$0xff] %vm19, 0.0
  $region17: #{bert_forward.16} parent=0 // pred_fallthru
    _
  %v22 = vld [vmem:[#allocation2] sm:$0xff]
  %v23 = vld [vmem:[#allocation2 + $0x8] sm:$0xff]
  %v24 = vld [vmem:[%s0] sm:$0xf]
  %v25 = vld [vmem:[%s0 + $0x4] sm:$0xf]
  %v26 = vld [vmem:[%s1] sm:$0xf]
  %v27 = vld [vmem:[%s1 + $0x4] sm:$0xf]
  %v28 = vld [vmem:[%s1 + $0x8] sm:$0xf]
  %v29 = vld [vmem:[%s1 + $0xc] sm:$0xf]
  %v32 = vunpack.c.l.b16 %v24
  %v33 = vunpack.c.l.b16 %v25
  %v34 = vpack.c.b16 %v33, %v32
  %v39 = vunpack.c.l.b16 %v26
  %v40 = vunpack.c.l.b16 %v27
  %v41 = vunpack.c.l.b16 %v28
  %v42 = vunpack.c.l.b16 %v29
  %v43 = vpack.c.b16 %v40, %v39
  %v44 = vpack.c.b16 %v42, %v41
  %vm47 = vcmask 261120
  %v49 = vsel %vm47, %v34, 0
  %51 = vmatprep.subr.bf16.mxu0 0
  %52 = vmatpush1.bf16.msra.mxu0 %v43
  %53 = vmatprep.subr.bf16.mxu0 0
  %54 = vmatpush1.bf16.msra.mxu0 %v44
  %55 = vmatprep.subr.bf16.mxu0 0
  %56 = vmatpush1.bf16.msra.mxu0 0
  %57 = vmatprep.subr.bf16.mxu0 0
  %58 = vmatpush1.bf16.msra.mxu0 0
  %59 = vmatprep.subr.bf16.mxu0 0
  %60 = vmatpush1.bf16.msra.mxu0 0
  %61 = vmatprep.subr.bf16.mxu0 0
  %62 = vmatpush1.bf16.msra.mxu0 0
  %63 = vmatprep.subr.bf16.mxu0 0
  %64 = vmatpush1.bf16.msra.mxu0 0
  %65 = vmatprep.subr.bf16.mxu0 0
  %66 = vmatpush1.bf16.msra.mxu0 0
  %67 = vmatprep.subr.bf16.mxu0 0
  %68 = vmatpush1.bf16.msra.mxu0 0
  %69 = vmatprep.subr.bf16.mxu0 0
  %70 = vmatpush1.bf16.msra.mxu0 0
  %71 = vmatprep.subr.bf16.mxu0 0
  %72 = vmatpush1.bf16.msra.mxu0 0
  %73 = vmatprep.subr.bf16.mxu0 0
  %74 = vmatpush1.bf16.msra.mxu0 0
  %75 = vmatprep.subr.bf16.mxu0 0
  %76 = vmatpush1.bf16.msra.mxu0 0
  %77 = vmatprep.subr.bf16.mxu0 0
  %78 = vmatpush1.bf16.msra.mxu0 0
  %79 = vmatprep.subr.bf16.mxu0 0
  %80 = vmatpush1.bf16.msra.mxu0 0
  %81 = vmatprep.subr.bf16.mxu0 0
  %82 = vmatpush1.bf16.msra.mxu0 0
  %83 = vmatprep.mubr.bf16.mxu0 0
  %84 = vmatmul.mubr.bf16.gmra.mrb[0].mxu0 %v49
  %v85 = vpop.f32.mrb[0].mxu0
  %v86 = vadd.f32 0.0, %v85
  %v87 = vpop.f32.mrb[0].mxu0
  %v88 = vpop.f32.mrb[0].mxu0
  %v89 = vadd.f32 0.0, %v88
  %v90 = vpop.f32.mrb[0].mxu0
  %91 = vdwg.mxu0
  %v92 = vadd.f32 %v22, %v86
  %v93 = vadd.f32 %v23, %v89
  %vm94 = vcmask 523264
  %95 = vst.msk [vmem:[#allocation2] sm:$0xff] %vm94, %v92
  %96 = vst.msk [vmem:[#allocation2 + $0x8] sm:$0xff] %vm94, %v93
  // Predicated region
  $region18: #{bert_forward.16} parent=0 // pred_check
    %p97 = pneg %p15
  $region19: #{bert_forward.16} parent=0 // pred_check_branch
    %99 = sbr.rel (%p97) target = $region21
  $region20: #{bert_forward.16} parent=0 // pred_region
    %v100 = vld [vmem:[#allocation2] sm:$0xff]
    %v101 = vld [vmem:[#allocation2 + $0x8] sm:$0xff]
    %v102 = vld [vmem:[%s2] sm:$0x1]
    %v104 = vlaneseq
    %v105 = vshrl.u32 %v104, 7
    %v106 = vsub.s32 0, %v105
    %v107 = vrot.slane %v102, %v106
    %v109 = vadd.f32 %v100, %v107
    %v110 = vadd.f32 %v101, %v107
    %v111 = vmul.f32 %v109, %v109
    %v112 = vmul.f32 %v110, %v110
    %v113 = vmul.f32 %v109, %v111
    %v114 = vmul.f32 %v110, %v112
    %v115 = vmul.f32 %v113, 0.044715
    %v116 = vmul.f32 %v114, 0.044715
    %v117 = vadd.f32 %v109, %v115
    %v118 = vadd.f32 %v110, %v116
    %v119 = vmul.f32 %v117, 0.7978846
    %v120 = vmul.f32 %v118, 0.7978846
    %v121 = vtanh.pop %v119
    %v122 = vtanh.pop %v120
    %v123 = vadd.f32 %v121, 1.0
    %v124 = vadd.f32 %v122, 1.0
    %v125 = vmul.f32 %v123, 0.5
    %v126 = vmul.f32 %v124, 0.5
    %v127 = vmul.f32 %v109, %v125
    %v128 = vmul.f32 %v110, %v126
    %v129 = vpack.c.bf16 %v128, %v127
    %v131 = vunpack.c.l.b16 %v129
    %v132 = vunpack.c.h.b16 %v129
    %v133 = vpack.c.b16 %v131, %v131
    %v134 = vpack.c.b16 %v132, %v132
    %vm137 = vcmask 519168
    %138 = vst.msk [vmem:[%s3] sm:$0xf] %vm137, %v133
    %139 = vst.msk [vmem:[%s3 + $0x4] sm:$0xf] %vm137, %v134
  $region21: #{bert_forward.16} parent=0 // pred_fallthru
    _
  // Predicated region
  $region22: #{bert_forward.16} parent=0 // pred_check
    _
  $region23: #{bert_forward.16} parent=0 // pred_check_branch
    %141 = sbr.rel (0) target = $region25
  $region24: #{bert_forward.16} parent=0 // pred_region
    _
  $region25: #{bert_forward.16} parent=0 // pred_fallthru
    _
  // Predicated region
  $region26: #{bert_forward.16} parent=0 // pred_check
    _
  $region27: #{bert_forward.16} parent=0 // pred_check_branch
    %143 = sbr.rel (0) target = $region29
  $region28: #{bert_forward.16} parent=0 // pred_region
    _
  $region29: #{bert_forward.16} parent=0 // pred_fallthru
    _

</llo_original>
